<compile_context>
chip_gen: v5e
topology: v5e:2x2
jax: 0.10.0
libtpu: 0.0.40
codegen_flags: <defaults>
</compile_context>

<pallas_src>
import math
from functools import partial

import jax
import jax.numpy as jnp
from jax import lax
from jax.experimental import pallas as pl
from jax.experimental.pallas import tpu as pltpu

_LOG2E = 1.4426950408889634   # 1 / ln(2)
_LN2 = 0.6931471805599453
_BIG = 1e9                    # sentinel (scaled) cost for padded rows/cols


def _pow_q(z, q):
    """Static power: identity for q==1, one VPU mul for q==2, clamped generic path."""
    if q == 1 or q == 1.0:
        return z
    if q == 2 or q == 2.0:
        return z * z
    zs = jnp.maximum(z, jnp.float32(1e-30))          # avoid log(0) in z**q lowering
    return jnp.where(z > 0, zs ** q, jnp.float32(0.0))


# --------------------------------------------------------------------------
# Fused kernel: build padded cost matrix in VMEM + base-2 log-domain Sinkhorn
# --------------------------------------------------------------------------
def _wasserstein_pair_kernel(c1_ref, c2t_ref, cost_ref, me_ref, u_ref, v_ref, *,
                             n, m, p, q, scale, eps_ln2, check_every,
                             max_outer, tol_u, hoist_me, unroll_inner):
    R_pad, C_pad = me_ref.shape
    zero = jnp.float32(0.0)
    big = jnp.float32(_BIG)

    # ---- build Me2 = M * (1/eps) * log2(e) once, dense lane-padded store ----
    c1 = c1_ref[...]                          # (R_pad, 2): rows 0..n-1 real
    c2t = c2t_ref[...]                        # (2, C_pad): cols 0..m-1 real

    x1 = c1[:, 0:1]                           # (R_pad, 1)
    y1 = c1[:, 1:2]
    x2 = c2t[0:1, :]                          # (1, C_pad)
    y2 = c2t[1:2, :]

    # torch.cdist(D1, D2, p=inf) -> Chebyshev (bogus padded rows/cols masked below).
    cheb = jnp.maximum(jnp.abs(x1 - x2), jnp.abs(y1 - y2))          # (R_pad, C_pad)

    # || d - proj_diag(d) ||_p = 0.5 * |x - y| * 2^(1/p)  (factor == 1 for p = inf).
    factor = 1.0 if math.isinf(p) else 2.0 ** (1.0 / p)
    d1diag = 0.5 * jnp.abs(x1 - y1) * factor                        # (R_pad, 1)
    d2diag = 0.5 * jnp.abs(x2 - y2) * factor                        # (1, C_pad)

    s = jnp.float32(scale)
    pd = _pow_q(cheb, q) * s
    pd1 = _pow_q(d1diag, q) * s
    pd2 = _pow_q(d2diag, q) * s

    row_ids = lax.broadcasted_iota(jnp.int32, (R_pad, C_pad), 0)
    col_ids = lax.broadcasted_iota(jnp.int32, (R_pad, C_pad), 1)
    is_pad = jnp.logical_or(row_ids > n, col_ids > m)
    is_last_row = row_ids == n
    is_last_col = col_ids == m

    M2 = jnp.where(is_last_row,
                   jnp.where(is_last_col, zero, pd2),
                   jnp.where(is_last_col, pd1, pd))
    me_ref[...] = jnp.where(is_pad, big, M2)

    # ---- log2 marginals generated in-kernel from static n, m ----
    # a = [1,...,1,m]  -> log2_a = [0,...,0,log2 m];  b = [1,...,1,n] similarly.
    row_iota = lax.broadcasted_iota(jnp.int32, (R_pad, 1), 0)
    col_iota = lax.broadcasted_iota(jnp.int32, (1, C_pad), 1)
    row_valid = row_iota <= n
    col_valid = col_iota <= m
    log2_a = jnp.where(row_iota == n, jnp.float32(math.log2(float(m))), zero)
    log2_b = jnp.where(col_iota == m, jnp.float32(math.log2(float(n))), zero)

    def lse2_rows(z):                         # log2-sum-exp2 over axis=1 -> (R_pad, 1)
        zmax = jnp.max(z, axis=1, keepdims=True)
        return zmax + jnp.log2(jnp.sum(jnp.exp2(z - zmax), axis=1, keepdims=True))

    def lse2_cols(z):                         # log2-sum-exp2 over axis=0 -> (1, C_pad)
        zmax = jnp.max(z, axis=0, keepdims=True)
        return zmax + jnp.log2(jnp.sum(jnp.exp2(z - zmax), axis=0, keepdims=True))

    def one_step(u, v, Me):
        # Potentials kept in log2 units: no eps / log2(e) multiplies in the hot loop.
        u = jnp.where(row_valid, log2_a - lse2_rows(v - Me), zero)
        v = jnp.where(col_valid, log2_b - lse2_cols(u - Me), zero)
        return u, v

    # Dual potentials live in VMEM scratch; the while-loop carry stays scalar-only.
    u_ref[...] = jnp.zeros((R_pad, 1), jnp.float32)
    v_ref[...] = jnp.zeros((1, C_pad), jnp.float32)

    def outer_cond(carry):
        it, not_converged = carry
        return jnp.logical_and(it < max_outer, not_converged > 0)

    def outer_body(carry):
        it, _ = carry
        u_prev = u_ref[...]
        v_prev = v_ref[...]
        if hoist_me:
            Me = me_ref[...]                  # load once per outer block (small case)
            step = lambda _, uv: one_step(uv[0], uv[1], Me)
        else:
            step = lambda _, uv: one_step(uv[0], uv[1], me_ref[...])
        u, v = lax.fori_loop(0, check_every, step, (u_prev, v_prev),
                             unroll=unroll_inner)
        u_ref[...] = u
        v_ref[...] = v
        err = jnp.max(jnp.abs(u - u_prev))
        return it + jnp.int32(1), (err > tol_u).astype(jnp.int32)

    lax.while_loop(outer_cond, outer_body, (jnp.int32(0), jnp.int32(1)))

    # ---- transport cost: sum(plan * M) = eps * ln(2) * sum(plan * Me2) ----
    # Padded entries: plan = exp2(0 + 0 - BIG) underflows to exactly 0, so they
    # contribute nothing; the (n, m) corner has Me2 == 0 so it contributes nothing.
    Me = me_ref[...]
    plan = jnp.exp2(u_ref[...] + v_ref[...] - Me)                   # (R_pad, C_pad)
    total = jnp.sum(plan * Me, axis=1, keepdims=True)
    total = jnp.sum(total, axis=0, keepdims=True)                   # (1, 1)
    cost_ref[...] = jnp.float32(eps_ln2) * total


def _wasserstein_pair(d1, d2, *, p, q, eps, n_iter, check_every, rtol):
    """Approximate ot.emd2 on the augmented cost matrix of one diagram pair."""
    n = int(d1.shape[0])
    m = int(d2.shape[0])

    # Pad to hardware tiles so the Sinkhorn hot loop is fully lane/sublane dense.
    r_pad = -(-(n + 1) // 8) * 8
    c_pad = -(-(m + 1) // 128) * 128

    d1f = d1.astype(jnp.float32)
    d2f = d2.astype(jnp.float32)
    c1 = jnp.zeros((r_pad, 2), jnp.float32).at[:n, :].set(d1f)       # (R_pad, 2)
    c2t = jnp.zeros((c_pad, 2), jnp.float32).at[:m, :].set(d2f).T    # (2, C_pad)

    check_every = max(1, min(int(check_every), int(n_iter)))
    max_outer = -(-int(n_iter) // check_every)
    tol_u = float(rtol) / _LN2                 # |df| <= rtol*eps  <=>  |du| <= rtol/ln2
    scale = (1.0 / float(eps)) * _LOG2E
    eps_ln2 = float(eps) * _LN2

    me_bytes = 4 * r_pad * c_pad
    hoist_me = me_bytes <= 96 * 1024           # fits comfortably in the vreg file
    unroll_inner = bool(hoist_me)

    # Generation-aware VMEM budget (v7x: 64 MiB per TC; v5e/v6e: 128 MiB).
    try:
        info = pltpu.get_tpu_info()
        vmem_cap = int(getattr(info, "vmem_capacity_bytes", 128 * 2 ** 20))
    except Exception:
        vmem_cap = 64 * 2 ** 20
    vmem_cap = int(0.85 * vmem_cap)
    scratch_bytes = me_bytes + 4 * (r_pad * 128 + 8 * c_pad)          # Me2 + duals (tile-padded)
    input_bytes = 2 * 4 * (r_pad * 128 + 8 * c_pad)                   # double-buffered inputs
    vmem_limit = min(vmem_cap,
                     max(16 * 2 ** 20, scratch_bytes + input_bytes + (2 << 20)))

    kern = partial(_wasserstein_pair_kernel, n=n, m=m, p=p, q=q,
                   scale=scale, eps_ln2=eps_ln2, check_every=check_every,
                   max_outer=max_outer, tol_u=tol_u, hoist_me=hoist_me,
                   unroll_inner=unroll_inner)

    cost = pl.pallas_call(
        kern,
        out_shape=jax.ShapeDtypeStruct((1, 1), jnp.float32),
        in_specs=[
            pl.BlockSpec((r_pad, 2), lambda: (0, 0)),
            pl.BlockSpec((2, c_pad), lambda: (0, 0)),
        ],
        out_specs=pl.BlockSpec((1, 1), lambda: (0, 0)),
        scratch_shapes=[
            pltpu.VMEM((r_pad, c_pad), jnp.float32),   # Me2, resident in VMEM only
            pltpu.VMEM((r_pad, 1), jnp.float32),       # u potential (log2 units)
            pltpu.VMEM((1, c_pad), jnp.float32),       # v potential (log2 units)
        ],
        compiler_params=pltpu.CompilerParams(vmem_limit_bytes=int(vmem_limit)),
    )(c1, c2t)
    return cost[0, 0]


def _diag_cost_powq(d, *, p, q):
    """Cost of matching every point of one diagram to the diagonal (exact)."""
    factor = 1.0 if math.isinf(p) else 2.0 ** (1.0 / p)
    dd = 0.5 * jnp.abs(d[:, 0] - d[:, 1]).astype(jnp.float32) * factor
    return jnp.sum(_pow_q(dd, q))


# --------------------------------------------------------------------------
# Module-equivalent wrapper
# --------------------------------------------------------------------------
def wasserstein_distance(X, Y, *, p=float("inf"), q=1.0,
                         eps=0.02, n_iter=500, check_every=25, rtol=1e-3):
    """Forward pass of WassersteinDistance(p, q) on diagrams X, Y.

    X, Y: a single (n_i, 2) diagram each, or lists of such diagrams."""
    if not isinstance(X, (list, tuple)):
        X = [X]
    if not isinstance(Y, (list, tuple)):
        Y = [Y]

    total_cost = jnp.float32(0.0)
    for d1, d2 in zip(X, Y):
        n = int(d1.shape[0])
        m = int(d2.shape[0])
        if n == 0 and m == 0:
            continue
        if n == 0:      # all D2 points matched to the diagonal (exact closed form)
            total_cost = total_cost + _diag_cost_powq(d2, p=p, q=q)
            continue
        if m == 0:      # all D1 points matched to the diagonal (exact closed form)
            total_cost = total_cost + _diag_cost_powq(d1, p=p, q=q)
            continue
        total_cost = total_cost + _wasserstein_pair(
            d1, d2, p=p, q=q, eps=eps, n_iter=n_iter,
            check_every=check_every, rtol=rtol)
    return total_cost ** (1.0 / q)


if __name__ == "__main__":
    key = jax.random.PRNGKey(0)
    k1, k2, k3, k4 = jax.random.split(key, 4)

    # Small synthetic persistence diagrams: birth ~ U[0,1), death = birth + U[0,1)
    n, m = 8, 12
    birth1 = jax.random.uniform(k1, (n, 1), dtype=jnp.float32)
    d1 = jnp.concatenate(
        [birth1, birth1 + jax.random.uniform(k2, (n, 1), dtype=jnp.float32)], axis=1)
    birth2 = jax.random.uniform(k3, (m, 1), dtype=jnp.float32)
    d2 = jnp.concatenate(
        [birth2, birth2 + jax.random.uniform(k4, (m, 1), dtype=jnp.float32)], axis=1)

    dist = wasserstein_distance(d1, d2, p=float("inf"), q=1.0)
    dist = jax.block_until_ready(dist)
    assert jnp.isfinite(dist)
    print("KERNEL_OK")
</pallas_src>

<mosaic_0001>
module attributes {stable_mosaic.version = 11 : i64} {
  func.func @_wasserstein_pair_kernel(%arg0: memref<16x2xf32, #tpu.memory_space<vmem>>, %arg1: memref<2x128xf32, #tpu.memory_space<vmem>>, %arg2: memref<1x1xf32, #tpu.memory_space<vmem>>, %arg3: memref<16x128xf32, #tpu.memory_space<vmem>>, %arg4: memref<16x1xf32, #tpu.memory_space<vmem>>, %arg5: memref<1x128xf32, #tpu.memory_space<vmem>>) attributes {dimension_semantics = [], scalar_prefetch = 0 : i64, scratch_operands = 3 : i64, tpu.core_type = #tpu.core_type<tc>} {
    %c0 = arith.constant 0 : index
    %c0_0 = arith.constant 0 : index
    %0 = vector.load %arg0[%c0, %c0_0] : memref<16x2xf32, #tpu.memory_space<vmem>>, vector<16x2xf32>
    %c0_1 = arith.constant 0 : index
    %c0_2 = arith.constant 0 : index
    %1 = vector.load %arg1[%c0_1, %c0_2] : memref<2x128xf32, #tpu.memory_space<vmem>>, vector<2x128xf32>
    %2 = vector.extract_strided_slice %0 {offsets = [0, 0], sizes = [16, 1], strides = [1, 1]} : vector<16x2xf32> to vector<16x1xf32>
    %3 = vector.extract_strided_slice %0 {offsets = [0, 1], sizes = [16, 1], strides = [1, 1]} : vector<16x2xf32> to vector<16x1xf32>
    %4 = vector.extract_strided_slice %1 {offsets = [0, 0], sizes = [1, 128], strides = [1, 1]} : vector<2x128xf32> to vector<1x128xf32>
    %5 = vector.extract_strided_slice %1 {offsets = [1, 0], sizes = [1, 128], strides = [1, 1]} : vector<2x128xf32> to vector<1x128xf32>
    %6 = vector.broadcast %2 : vector<16x1xf32> to vector<16x128xf32>
    %7 = vector.broadcast %4 : vector<1x128xf32> to vector<16x128xf32>
    %8 = arith.subf %6, %7 : vector<16x128xf32>
    %9 = math.absf %8 : vector<16x128xf32>
    %10 = vector.broadcast %3 : vector<16x1xf32> to vector<16x128xf32>
    %11 = vector.broadcast %5 : vector<1x128xf32> to vector<16x128xf32>
    %12 = arith.subf %10, %11 : vector<16x128xf32>
    %13 = math.absf %12 : vector<16x128xf32>
    %14 = arith.maximumf %9, %13 : vector<16x128xf32>
    %15 = arith.subf %2, %3 : vector<16x1xf32>
    %16 = math.absf %15 : vector<16x1xf32>
    %cst = arith.constant 5.000000e-01 : f32
    %17 = vector.broadcast %cst : f32 to vector<16x1xf32>
    %18 = arith.mulf %17, %16 : vector<16x1xf32>
    %cst_3 = arith.constant 1.000000e+00 : f32
    %19 = vector.broadcast %cst_3 : f32 to vector<16x1xf32>
    %20 = arith.mulf %18, %19 : vector<16x1xf32>
    %21 = arith.subf %4, %5 : vector<1x128xf32>
    %22 = math.absf %21 : vector<1x128xf32>
    %cst_4 = arith.constant 5.000000e-01 : f32
    %23 = vector.broadcast %cst_4 : f32 to vector<1x128xf32>
    %24 = arith.mulf %23, %22 : vector<1x128xf32>
    %cst_5 = arith.constant 1.000000e+00 : f32
    %25 = vector.broadcast %cst_5 : f32 to vector<1x128xf32>
    %26 = arith.mulf %24, %25 : vector<1x128xf32>
    %cst_6 = arith.constant 72.1347503 : f32
    %27 = vector.broadcast %cst_6 : f32 to vector<16x128xf32>
    %28 = arith.mulf %14, %27 : vector<16x128xf32>
    %cst_7 = arith.constant 72.1347503 : f32
    %29 = vector.broadcast %cst_7 : f32 to vector<16x1xf32>
    %30 = arith.mulf %20, %29 : vector<16x1xf32>
    %cst_8 = arith.constant 72.1347503 : f32
    %31 = vector.broadcast %cst_8 : f32 to vector<1x128xf32>
    %32 = arith.mulf %26, %31 : vector<1x128xf32>
    %33 = tpu.iota {dimensions = array<i32: 0>} : vector<16x128xi32>
    %34 = tpu.iota {dimensions = array<i32: 1>} : vector<16x128xi32>
    %c8_i32 = arith.constant 8 : i32
    %35 = vector.broadcast %c8_i32 : i32 to vector<16x128xi32>
    %36 = arith.cmpi sgt, %33, %35 : vector<16x128xi32>
    %c12_i32 = arith.constant 12 : i32
    %37 = vector.broadcast %c12_i32 : i32 to vector<16x128xi32>
    %38 = arith.cmpi sgt, %34, %37 : vector<16x128xi32>
    %39 = arith.ori %36, %38 : vector<16x128xi1>
    %c8_i32_9 = arith.constant 8 : i32
    %40 = vector.broadcast %c8_i32_9 : i32 to vector<16x128xi32>
    %41 = arith.cmpi eq, %33, %40 : vector<16x128xi32>
    %c12_i32_10 = arith.constant 12 : i32
    %42 = vector.broadcast %c12_i32_10 : i32 to vector<16x128xi32>
    %43 = arith.cmpi eq, %34, %42 : vector<16x128xi32>
    %cst_11 = arith.constant 0.000000e+00 : f32
    %44 = vector.broadcast %cst_11 : f32 to vector<16x128xf32>
    %45 = vector.shape_cast %32 : vector<1x128xf32> to vector<1x128xf32>
    %46 = vector.broadcast %45 : vector<1x128xf32> to vector<16x128xf32>
    %47 = arith.select %43, %44, %46 : vector<16x128xi1>, vector<16x128xf32>
    %48 = vector.shape_cast %30 : vector<16x1xf32> to vector<16x1xf32>
    %49 = vector.broadcast %48 : vector<16x1xf32> to vector<16x128xf32>
    %50 = arith.select %43, %49, %28 : vector<16x128xi1>, vector<16x128xf32>
    %51 = arith.select %41, %47, %50 : vector<16x128xi1>, vector<16x128xf32>
    %cst_12 = arith.constant 1.000000e+09 : f32
    %52 = vector.broadcast %cst_12 : f32 to vector<16x128xf32>
    %53 = arith.select %39, %52, %51 : vector<16x128xi1>, vector<16x128xf32>
    %c0_13 = arith.constant 0 : index
    %c0_14 = arith.constant 0 : index
    %54 = vector.load %arg3[%c0_13, %c0_14] : memref<16x128xf32, #tpu.memory_space<vmem>>, vector<16x128xf32>
    tpu.vector_store %arg3[%c0_13, %c0_14], %53 {strides = array<i32>} : memref<16x128xf32, #tpu.memory_space<vmem>>, vector<16x128xf32>,
    %55 = tpu.iota {dimensions = array<i32: 0>} : vector<16x1xi32>
    %56 = tpu.iota {dimensions = array<i32: 1>} : vector<1x128xi32>
    %c8_i32_15 = arith.constant 8 : i32
    %57 = vector.broadcast %c8_i32_15 : i32 to vector<16x1xi32>
    %58 = arith.cmpi sle, %55, %57 : vector<16x1xi32>
    %c12_i32_16 = arith.constant 12 : i32
    %59 = vector.broadcast %c12_i32_16 : i32 to vector<1x128xi32>
    %60 = arith.cmpi sle, %56, %59 : vector<1x128xi32>
    %c8_i32_17 = arith.constant 8 : i32
    %61 = vector.broadcast %c8_i32_17 : i32 to vector<16x1xi32>
    %62 = arith.cmpi eq, %55, %61 : vector<16x1xi32>
    %cst_18 = arith.constant 3.58496261 : f32
    %cst_19 = arith.constant 0.000000e+00 : f32
    %63 = vector.broadcast %cst_18 : f32 to vector<16x1xf32>
    %64 = vector.broadcast %cst_19 : f32 to vector<16x1xf32>
    %65 = arith.select %62, %63, %64 : vector<16x1xi1>, vector<16x1xf32>
    %c12_i32_20 = arith.constant 12 : i32
    %66 = vector.broadcast %c12_i32_20 : i32 to vector<1x128xi32>
    %67 = arith.cmpi eq, %56, %66 : vector<1x128xi32>
    %cst_21 = arith.constant 3.000000e+00 : f32
    %cst_22 = arith.constant 0.000000e+00 : f32
    %68 = vector.broadcast %cst_21 : f32 to vector<1x128xf32>
    %69 = vector.broadcast %cst_22 : f32 to vector<1x128xf32>
    %70 = arith.select %67, %68, %69 : vector<1x128xi1>, vector<1x128xf32>
    %cst_23 = arith.constant 0.000000e+00 : f32
    %71 = vector.broadcast %cst_23 : f32 to vector<16x1xf32>
    %c0_24 = arith.constant 0 : index
    %c0_25 = arith.constant 0 : index
    %72 = vector.load %arg4[%c0_24, %c0_25] : memref<16x1xf32, #tpu.memory_space<vmem>>, vector<16x1xf32>
    tpu.vector_store %arg4[%c0_24, %c0_25], %71 {strides = array<i32>} : memref<16x1xf32, #tpu.memory_space<vmem>>, vector<16x1xf32>,
    %cst_26 = arith.constant 0.000000e+00 : f32
    %73 = vector.broadcast %cst_26 : f32 to vector<1x128xf32>
    %c0_27 = arith.constant 0 : index
    %c0_28 = arith.constant 0 : index
    %74 = vector.load %arg5[%c0_27, %c0_28] : memref<1x128xf32, #tpu.memory_space<vmem>>, vector<1x128xf32>
    tpu.vector_store %arg5[%c0_27, %c0_28], %73 {strides = array<i32>} : memref<1x128xf32, #tpu.memory_space<vmem>>, vector<1x128xf32>,
    %cst_29 = arith.constant 0.000000e+00 : f32
    %c0_i32 = arith.constant 0 : i32
    %c1_i32 = arith.constant 1 : i32
    %75:2 = scf.while (%arg6 = %c0_i32, %arg7 = %c1_i32) : (i32, i32) -> (i32, i32) {
      %c20_i32 = arith.constant 20 : i32
      %92 = arith.cmpi slt, %arg6, %c20_i32 : i32
      %c0_i32_41 = arith.constant 0 : i32
      %93 = arith.cmpi sgt, %arg7, %c0_i32_41 : i32
      %94 = arith.andi %92, %93 : i1
      scf.condition(%94) %arg6, %arg7 : i32, i32
    } do {
    ^bb0(%arg6: i32, %arg7: i32):
      %c0_41 = arith.constant 0 : index
      %c0_42 = arith.constant 0 : index
      %92 = vector.load %arg4[%c0_41, %c0_42] : memref<16x1xf32, #tpu.memory_space<vmem>>, vector<16x1xf32>
      %c0_43 = arith.constant 0 : index
      %c0_44 = arith.constant 0 : index
      %93 = vector.load %arg5[%c0_43, %c0_44] : memref<1x128xf32, #tpu.memory_space<vmem>>, vector<1x128xf32>
      %c0_45 = arith.constant 0 : index
      %c0_46 = arith.constant 0 : index
      %94 = vector.load %arg3[%c0_45, %c0_46] : memref<16x128xf32, #tpu.memory_space<vmem>>, vector<16x128xf32>
      %c0_i32_47 = arith.constant 0 : i32
      %95 = vector.broadcast %93 : vector<1x128xf32> to vector<16x128xf32>
      %96 = arith.subf %95, %94 : vector<16x128xf32>
      %cst_48 = arith.constant dense<0xFF800000> : vector<16xf32>
      %97 = vector.multi_reduction <maximumf>, %96, %cst_48 [1] : vector<16x128xf32> to vector<16xf32>
      %98 = vector.shape_cast %97 : vector<16xf32> to vector<16x1xf32>
      %99 = vector.broadcast %98 : vector<16x1xf32> to vector<16x128xf32>
      %100 = arith.subf %96, %99 : vector<16x128xf32>
      %101 = math.exp2 %100 : vector<16x128xf32>
      %cst_49 = arith.constant dense<0.000000e+00> : vector<16xf32>
      %102 = vector.multi_reduction <add>, %101, %cst_49 [1] : vector<16x128xf32> to vector<16xf32>
      %103 = vector.shape_cast %102 : vector<16xf32> to vector<16x1xf32>
      %104 = math.log %103 : vector<16x1xf32>
      %cst_50 = arith.constant 2.000000e+00 : f32
      %105 = math.log %cst_50 : f32
      %106 = vector.broadcast %105 : f32 to vector<16x1xf32>
      %107 = arith.divf %104, %106 : vector<16x1xf32>
      %108 = arith.addf %98, %107 : vector<16x1xf32>
      %109 = arith.subf %65, %108 : vector<16x1xf32>
      %110 = vector.broadcast %cst_29 : f32 to vector<16x1xf32>
      %111 = arith.select %58, %109, %110 : vector<16x1xi1>, vector<16x1xf32>
      %112 = vector.broadcast %111 : vector<16x1xf32> to vector<16x128xf32>
      %113 = arith.subf %112, %94 : vector<16x128xf32>
      %cst_51 = arith.constant dense<0xFF800000> : vector<128xf32>
      %114 = vector.multi_reduction <maximumf>, %113, %cst_51 [0] : vector<16x128xf32> to vector<128xf32>
      %115 = vector.shape_cast %114 : vector<128xf32> to vector<1x128xf32>
      %116 = vector.broadcast %115 : vector<1x128xf32> to vector<16x128xf32>
      %117 = arith.subf %113, %116 : vector<16x128xf32>
      %118 = math.exp2 %117 : vector<16x128xf32>
      %cst_52 = arith.constant dense<0.000000e+00> : vector<128xf32>
      %119 = vector.multi_reduction <add>, %118, %cst_52 [0] : vector<16x128xf32> to vector<128xf32>
      %120 = vector.shape_cast %119 : vector<128xf32> to vector<1x128xf32>
      %121 = math.log %120 : vector<1x128xf32>
      %cst_53 = arith.constant 2.000000e+00 : f32
      %122 = math.log %cst_53 : f32
      %123 = vector.broadcast %122 : f32 to vector<1x128xf32>
      %124 = arith.divf %121, %123 : vector<1x128xf32>
      %125 = arith.addf %115, %124 : vector<1x128xf32>
      %126 = arith.subf %70, %125 : vector<1x128xf32>
      %127 = vector.broadcast %cst_29 : f32 to vector<1x128xf32>
      %128 = arith.select %60, %126, %127 : vector<1x128xi1>, vector<1x128xf32>
      %c1_i32_54 = arith.constant 1 : i32
      %129 = vector.broadcast %128 : vector<1x128xf32> to vector<16x128xf32>
      %130 = arith.subf %129, %94 : vector<16x128xf32>
      %cst_55 = arith.constant dense<0xFF800000> : vector<16xf32>
      %131 = vector.multi_reduction <maximumf>, %130, %cst_55 [1] : vector<16x128xf32> to vector<16xf32>
      %132 = vector.shape_cast %131 : vector<16xf32> to vector<16x1xf32>
      %133 = vector.broadcast %132 : vector<16x1xf32> to vector<16x128xf32>
      %134 = arith.subf %130, %133 : vector<16x128xf32>
      %135 = math.exp2 %134 : vector<16x128xf32>
      %cst_56 = arith.constant dense<0.000000e+00> : vector<16xf32>
      %136 = vector.multi_reduction <add>, %135, %cst_56 [1] : vector<16x128xf32> to vector<16xf32>
      %137 = vector.shape_cast %136 : vector<16xf32> to vector<16x1xf32>
      %138 = math.log %137 : vector<16x1xf32>
      %cst_57 = arith.constant 2.000000e+00 : f32
      %139 = math.log %cst_57 : f32
      %140 = vector.broadcast %139 : f32 to vector<16x1xf32>
      %141 = arith.divf %138, %140 : vector<16x1xf32>
      %142 = arith.addf %132, %141 : vector<16x1xf32>
      %143 = arith.subf %65, %142 : vector<16x1xf32>
      %144 = vector.broadcast %cst_29 : f32 to vector<16x1xf32>
      %145 = arith.select %58, %143, %144 : vector<16x1xi1>, vector<16x1xf32>
      %146 = vector.broadcast %145 : vector<16x1xf32> to vector<16x128xf32>
      %147 = arith.subf %146, %94 : vector<16x128xf32>
      %cst_58 = arith.constant dense<0xFF800000> : vector<128xf32>
      %148 = vector.multi_reduction <maximumf>, %147, %cst_58 [0] : vector<16x128xf32> to vector<128xf32>
      %149 = vector.shape_cast %148 : vector<128xf32> to vector<1x128xf32>
      %150 = vector.broadcast %149 : vector<1x128xf32> to vector<16x128xf32>
      %151 = arith.subf %147, %150 : vector<16x128xf32>
      %152 = math.exp2 %151 : vector<16x128xf32>
      %cst_59 = arith.constant dense<0.000000e+00> : vector<128xf32>
      %153 = vector.multi_reduction <add>, %152, %cst_59 [0] : vector<16x128xf32> to vector<128xf32>
      %154 = vector.shape_cast %153 : vector<128xf32> to vector<1x128xf32>
      %155 = math.log %154 : vector<1x128xf32>
      %cst_60 = arith.constant 2.000000e+00 : f32
      %156 = math.log %cst_60 : f32
      %157 = vector.broadcast %156 : f32 to vector<1x128xf32>
      %158 = arith.divf %155, %157 : vector<1x128xf32>
      %159 = arith.addf %149, %158 : vector<1x128xf32>
      %160 = arith.subf %70, %159 : vector<1x128xf32>
      %161 = vector.broadcast %cst_29 : f32 to vector<1x128xf32>
      %162 = arith.select %60, %160, %161 : vector<1x128xi1>, vector<1x128xf32>
      %c2_i32 = arith.constant 2 : i32
      %163 = vector.broadcast %162 : vector<1x128xf32> to vector<16x128xf32>
      %164 = arith.subf %163, %94 : vector<16x128xf32>
      %cst_61 = arith.constant dense<0xFF800000> : vector<16xf32>
      %165 = vector.multi_reduction <maximumf>, %164, %cst_61 [1] : vector<16x128xf32> to vector<16xf32>
      %166 = vector.shape_cast %165 : vector<16xf32> to vector<16x1xf32>
      %167 = vector.broadcast %166 : vector<16x1xf32> to vector<16x128xf32>
      %168 = arith.subf %164, %167 : vector<16x128xf32>
      %169 = math.exp2 %168 : vector<16x128xf32>
      %cst_62 = arith.constant dense<0.000000e+00> : vector<16xf32>
      %170 = vector.multi_reduction <add>, %169, %cst_62 [1] : vector<16x128xf32> to vector<16xf32>
      %171 = vector.shape_cast %170 : vector<16xf32> to vector<16x1xf32>
      %172 = math.log %171 : vector<16x1xf32>
      %cst_63 = arith.constant 2.000000e+00 : f32
      %173 = math.log %cst_63 : f32
      %174 = vector.broadcast %173 : f32 to vector<16x1xf32>
      %175 = arith.divf %172, %174 : vector<16x1xf32>
      %176 = arith.addf %166, %175 : vector<16x1xf32>
      %177 = arith.subf %65, %176 : vector<16x1xf32>
      %178 = vector.broadcast %cst_29 : f32 to vector<16x1xf32>
      %179 = arith.select %58, %177, %178 : vector<16x1xi1>, vector<16x1xf32>
      %180 = vector.broadcast %179 : vector<16x1xf32> to vector<16x128xf32>
      %181 = arith.subf %180, %94 : vector<16x128xf32>
      %cst_64 = arith.constant dense<0xFF800000> : vector<128xf32>
      %182 = vector.multi_reduction <maximumf>, %181, %cst_64 [0] : vector<16x128xf32> to vector<128xf32>
      %183 = vector.shape_cast %182 : vector<128xf32> to vector<1x128xf32>
      %184 = vector.broadcast %183 : vector<1x128xf32> to vector<16x128xf32>
      %185 = arith.subf %181, %184 : vector<16x128xf32>
      %186 = math.exp2 %185 : vector<16x128xf32>
      %cst_65 = arith.constant dense<0.000000e+00> : vector<128xf32>
      %187 = vector.multi_reduction <add>, %186, %cst_65 [0] : vector<16x128xf32> to vector<128xf32>
      %188 = vector.shape_cast %187 : vector<128xf32> to vector<1x128xf32>
      %189 = math.log %188 : vector<1x128xf32>
      %cst_66 = arith.constant 2.000000e+00 : f32
      %190 = math.log %cst_66 : f32
      %191 = vector.broadcast %190 : f32 to vector<1x128xf32>
      %192 = arith.divf %189, %191 : vector<1x128xf32>
      %193 = arith.addf %183, %192 : vector<1x128xf32>
      %194 = arith.subf %70, %193 : vector<1x128xf32>
      %195 = vector.broadcast %cst_29 : f32 to vector<1x128xf32>
      %196 = arith.select %60, %194, %195 : vector<1x128xi1>, vector<1x128xf32>
      %c3_i32 = arith.constant 3 : i32
      %197 = vector.broadcast %196 : vector<1x128xf32> to vector<16x128xf32>
      %198 = arith.subf %197, %94 : vector<16x128xf32>
      %cst_67 = arith.constant dense<0xFF800000> : vector<16xf32>
      %199 = vector.multi_reduction <maximumf>, %198, %cst_67 [1] : vector<16x128xf32> to vector<16xf32>
      %200 = vector.shape_cast %199 : vector<16xf32> to vector<16x1xf32>
      %201 = vector.broadcast %200 : vector<16x1xf32> to vector<16x128xf32>
      %202 = arith.subf %198, %201 : vector<16x128xf32>
      %203 = math.exp2 %202 : vector<16x128xf32>
      %cst_68 = arith.constant dense<0.000000e+00> : vector<16xf32>
      %204 = vector.multi_reduction <add>, %203, %cst_68 [1] : vector<16x128xf32> to vector<16xf32>
      %205 = vector.shape_cast %204 : vector<16xf32> to vector<16x1xf32>
      %206 = math.log %205 : vector<16x1xf32>
      %cst_69 = arith.constant 2.000000e+00 : f32
      %207 = math.log %cst_69 : f32
      %208 = vector.broadcast %207 : f32 to vector<16x1xf32>
      %209 = arith.divf %206, %208 : vector<16x1xf32>
      %210 = arith.addf %200, %209 : vector<16x1xf32>
      %211 = arith.subf %65, %210 : vector<16x1xf32>
      %212 = vector.broadcast %cst_29 : f32 to vector<16x1xf32>
      %213 = arith.select %58, %211, %212 : vector<16x1xi1>, vector<16x1xf32>
      %214 = vector.broadcast %213 : vector<16x1xf32> to vector<16x128xf32>
      %215 = arith.subf %214, %94 : vector<16x128xf32>
      %cst_70 = arith.constant dense<0xFF800000> : vector<128xf32>
      %216 = vector.multi_reduction <maximumf>, %215, %cst_70 [0] : vector<16x128xf32> to vector<128xf32>
      %217 = vector.shape_cast %216 : vector<128xf32> to vector<1x128xf32>
      %218 = vector.broadcast %217 : vector<1x128xf32> to vector<16x128xf32>
      %219 = arith.subf %215, %218 : vector<16x128xf32>
      %220 = math.exp2 %219 : vector<16x128xf32>
      %cst_71 = arith.constant dense<0.000000e+00> : vector<128xf32>
      %221 = vector.multi_reduction <add>, %220, %cst_71 [0] : vector<16x128xf32> to vector<128xf32>
      %222 = vector.shape_cast %221 : vector<128xf32> to vector<1x128xf32>
      %223 = math.log %222 : vector<1x128xf32>
      %cst_72 = arith.constant 2.000000e+00 : f32
      %224 = math.log %cst_72 : f32
      %225 = vector.broadcast %224 : f32 to vector<1x128xf32>
      %226 = arith.divf %223, %225 : vector<1x128xf32>
      %227 = arith.addf %217, %226 : vector<1x128xf32>
      %228 = arith.subf %70, %227 : vector<1x128xf32>
      %229 = vector.broadcast %cst_29 : f32 to vector<1x128xf32>
      %230 = arith.select %60, %228, %229 : vector<1x128xi1>, vector<1x128xf32>
      %c4_i32 = arith.constant 4 : i32
      %231 = vector.broadcast %230 : vector<1x128xf32> to vector<16x128xf32>
      %232 = arith.subf %231, %94 : vector<16x128xf32>
      %cst_73 = arith.constant dense<0xFF800000> : vector<16xf32>
      %233 = vector.multi_reduction <maximumf>, %232, %cst_73 [1] : vector<16x128xf32> to vector<16xf32>
      %234 = vector.shape_cast %233 : vector<16xf32> to vector<16x1xf32>
      %235 = vector.broadcast %234 : vector<16x1xf32> to vector<16x128xf32>
      %236 = arith.subf %232, %235 : vector<16x128xf32>
      %237 = math.exp2 %236 : vector<16x128xf32>
      %cst_74 = arith.constant dense<0.000000e+00> : vector<16xf32>
      %238 = vector.multi_reduction <add>, %237, %cst_74 [1] : vector<16x128xf32> to vector<16xf32>
      %239 = vector.shape_cast %238 : vector<16xf32> to vector<16x1xf32>
      %240 = math.log %239 : vector<16x1xf32>
      %cst_75 = arith.constant 2.000000e+00 : f32
      %241 = math.log %cst_75 : f32
      %242 = vector.broadcast %241 : f32 to vector<16x1xf32>
      %243 = arith.divf %240, %242 : vector<16x1xf32>
      %244 = arith.addf %234, %243 : vector<16x1xf32>
      %245 = arith.subf %65, %244 : vector<16x1xf32>
      %246 = vector.broadcast %cst_29 : f32 to vector<16x1xf32>
      %247 = arith.select %58, %245, %246 : vector<16x1xi1>, vector<16x1xf32>
      %248 = vector.broadcast %247 : vector<16x1xf32> to vector<16x128xf32>
      %249 = arith.subf %248, %94 : vector<16x128xf32>
      %cst_76 = arith.constant dense<0xFF800000> : vector<128xf32>
      %250 = vector.multi_reduction <maximumf>, %249, %cst_76 [0] : vector<16x128xf32> to vector<128xf32>
      %251 = vector.shape_cast %250 : vector<128xf32> to vector<1x128xf32>
      %252 = vector.broadcast %251 : vector<1x128xf32> to vector<16x128xf32>
      %253 = arith.subf %249, %252 : vector<16x128xf32>
      %254 = math.exp2 %253 : vector<16x128xf32>
      %cst_77 = arith.constant dense<0.000000e+00> : vector<128xf32>
      %255 = vector.multi_reduction <add>, %254, %cst_77 [0] : vector<16x128xf32> to vector<128xf32>
      %256 = vector.shape_cast %255 : vector<128xf32> to vector<1x128xf32>
      %257 = math.log %256 : vector<1x128xf32>
      %cst_78 = arith.constant 2.000000e+00 : f32
      %258 = math.log %cst_78 : f32
      %259 = vector.broadcast %258 : f32 to vector<1x128xf32>
      %260 = arith.divf %257, %259 : vector<1x128xf32>
      %261 = arith.addf %251, %260 : vector<1x128xf32>
      %262 = arith.subf %70, %261 : vector<1x128xf32>
      %263 = vector.broadcast %cst_29 : f32 to vector<1x128xf32>
      %264 = arith.select %60, %262, %263 : vector<1x128xi1>, vector<1x128xf32>
      %c5_i32 = arith.constant 5 : i32
      %265 = vector.broadcast %264 : vector<1x128xf32> to vector<16x128xf32>
      %266 = arith.subf %265, %94 : vector<16x128xf32>
      %cst_79 = arith.constant dense<0xFF800000> : vector<16xf32>
      %267 = vector.multi_reduction <maximumf>, %266, %cst_79 [1] : vector<16x128xf32> to vector<16xf32>
      %268 = vector.shape_cast %267 : vector<16xf32> to vector<16x1xf32>
      %269 = vector.broadcast %268 : vector<16x1xf32> to vector<16x128xf32>
      %270 = arith.subf %266, %269 : vector<16x128xf32>
      %271 = math.exp2 %270 : vector<16x128xf32>
      %cst_80 = arith.constant dense<0.000000e+00> : vector<16xf32>
      %272 = vector.multi_reduction <add>, %271, %cst_80 [1] : vector<16x128xf32> to vector<16xf32>
      %273 = vector.shape_cast %272 : vector<16xf32> to vector<16x1xf32>
      %274 = math.log %273 : vector<16x1xf32>
      %cst_81 = arith.constant 2.000000e+00 : f32
      %275 = math.log %cst_81 : f32
      %276 = vector.broadcast %275 : f32 to vector<16x1xf32>
      %277 = arith.divf %274, %276 : vector<16x1xf32>
      %278 = arith.addf %268, %277 : vector<16x1xf32>
      %279 = arith.subf %65, %278 : vector<16x1xf32>
      %280 = vector.broadcast %cst_29 : f32 to vector<16x1xf32>
      %281 = arith.select %58, %279, %280 : vector<16x1xi1>, vector<16x1xf32>
      %282 = vector.broadcast %281 : vector<16x1xf32> to vector<16x128xf32>
      %283 = arith.subf %282, %94 : vector<16x128xf32>
      %cst_82 = arith.constant dense<0xFF800000> : vector<128xf32>
      %284 = vector.multi_reduction <maximumf>, %283, %cst_82 [0] : vector<16x128xf32> to vector<128xf32>
      %285 = vector.shape_cast %284 : vector<128xf32> to vector<1x128xf32>
      %286 = vector.broadcast %285 : vector<1x128xf32> to vector<16x128xf32>
      %287 = arith.subf %283, %286 : vector<16x128xf32>
      %288 = math.exp2 %287 : vector<16x128xf32>
      %cst_83 = arith.constant dense<0.000000e+00> : vector<128xf32>
      %289 = vector.multi_reduction <add>, %288, %cst_83 [0] : vector<16x128xf32> to vector<128xf32>
      %290 = vector.shape_cast %289 : vector<128xf32> to vector<1x128xf32>
      %291 = math.log %290 : vector<1x128xf32>
      %cst_84 = arith.constant 2.000000e+00 : f32
      %292 = math.log %cst_84 : f32
      %293 = vector.broadcast %292 : f32 to vector<1x128xf32>
      %294 = arith.divf %291, %293 : vector<1x128xf32>
      %295 = arith.addf %285, %294 : vector<1x128xf32>
      %296 = arith.subf %70, %295 : vector<1x128xf32>
      %297 = vector.broadcast %cst_29 : f32 to vector<1x128xf32>
      %298 = arith.select %60, %296, %297 : vector<1x128xi1>, vector<1x128xf32>
      %c6_i32 = arith.constant 6 : i32
      %299 = vector.broadcast %298 : vector<1x128xf32> to vector<16x128xf32>
      %300 = arith.subf %299, %94 : vector<16x128xf32>
      %cst_85 = arith.constant dense<0xFF800000> : vector<16xf32>
      %301 = vector.multi_reduction <maximumf>, %300, %cst_85 [1] : vector<16x128xf32> to vector<16xf32>
      %302 = vector.shape_cast %301 : vector<16xf32> to vector<16x1xf32>
      %303 = vector.broadcast %302 : vector<16x1xf32> to vector<16x128xf32>
      %304 = arith.subf %300, %303 : vector<16x128xf32>
      %305 = math.exp2 %304 : vector<16x128xf32>
      %cst_86 = arith.constant dense<0.000000e+00> : vector<16xf32>
      %306 = vector.multi_reduction <add>, %305, %cst_86 [1] : vector<16x128xf32> to vector<16xf32>
      %307 = vector.shape_cast %306 : vector<16xf32> to vector<16x1xf32>
      %308 = math.log %307 : vector<16x1xf32>
      %cst_87 = arith.constant 2.000000e+00 : f32
      %309 = math.log %cst_87 : f32
      %310 = vector.broadcast %309 : f32 to vector<16x1xf32>
      %311 = arith.divf %308, %310 : vector<16x1xf32>
      %312 = arith.addf %302, %311 : vector<16x1xf32>
      %313 = arith.subf %65, %312 : vector<16x1xf32>
      %314 = vector.broadcast %cst_29 : f32 to vector<16x1xf32>
      %315 = arith.select %58, %313, %314 : vector<16x1xi1>, vector<16x1xf32>
      %316 = vector.broadcast %315 : vector<16x1xf32> to vector<16x128xf32>
      %317 = arith.subf %316, %94 : vector<16x128xf32>
      %cst_88 = arith.constant dense<0xFF800000> : vector<128xf32>
      %318 = vector.multi_reduction <maximumf>, %317, %cst_88 [0] : vector<16x128xf32> to vector<128xf32>
      %319 = vector.shape_cast %318 : vector<128xf32> to vector<1x128xf32>
      %320 = vector.broadcast %319 : vector<1x128xf32> to vector<16x128xf32>
      %321 = arith.subf %317, %320 : vector<16x128xf32>
      %322 = math.exp2 %321 : vector<16x128xf32>
      %cst_89 = arith.constant dense<0.000000e+00> : vector<128xf32>
      %323 = vector.multi_reduction <add>, %322, %cst_89 [0] : vector<16x128xf32> to vector<128xf32>
      %324 = vector.shape_cast %323 : vector<128xf32> to vector<1x128xf32>
      %325 = math.log %324 : vector<1x128xf32>
      %cst_90 = arith.constant 2.000000e+00 : f32
      %326 = math.log %cst_90 : f32
      %327 = vector.broadcast %326 : f32 to vector<1x128xf32>
      %328 = arith.divf %325, %327 : vector<1x128xf32>
      %329 = arith.addf %319, %328 : vector<1x128xf32>
      %330 = arith.subf %70, %329 : vector<1x128xf32>
      %331 = vector.broadcast %cst_29 : f32 to vector<1x128xf32>
      %332 = arith.select %60, %330, %331 : vector<1x128xi1>, vector<1x128xf32>
      %c7_i32 = arith.constant 7 : i32
      %333 = vector.broadcast %332 : vector<1x128xf32> to vector<16x128xf32>
      %334 = arith.subf %333, %94 : vector<16x128xf32>
      %cst_91 = arith.constant dense<0xFF800000> : vector<16xf32>
      %335 = vector.multi_reduction <maximumf>, %334, %cst_91 [1] : vector<16x128xf32> to vector<16xf32>
      %336 = vector.shape_cast %335 : vector<16xf32> to vector<16x1xf32>
      %337 = vector.broadcast %336 : vector<16x1xf32> to vector<16x128xf32>
      %338 = arith.subf %334, %337 : vector<16x128xf32>
      %339 = math.exp2 %338 : vector<16x128xf32>
      %cst_92 = arith.constant dense<0.000000e+00> : vector<16xf32>
      %340 = vector.multi_reduction <add>, %339, %cst_92 [1] : vector<16x128xf32> to vector<16xf32>
      %341 = vector.shape_cast %340 : vector<16xf32> to vector<16x1xf32>
      %342 = math.log %341 : vector<16x1xf32>
      %cst_93 = arith.constant 2.000000e+00 : f32
      %343 = math.log %cst_93 : f32
      %344 = vector.broadcast %343 : f32 to vector<16x1xf32>
      %345 = arith.divf %342, %344 : vector<16x1xf32>
      %346 = arith.addf %336, %345 : vector<16x1xf32>
      %347 = arith.subf %65, %346 : vector<16x1xf32>
      %348 = vector.broadcast %cst_29 : f32 to vector<16x1xf32>
      %349 = arith.select %58, %347, %348 : vector<16x1xi1>, vector<16x1xf32>
      %350 = vector.broadcast %349 : vector<16x1xf32> to vector<16x128xf32>
      %351 = arith.subf %350, %94 : vector<16x128xf32>
      %cst_94 = arith.constant dense<0xFF800000> : vector<128xf32>
      %352 = vector.multi_reduction <maximumf>, %351, %cst_94 [0] : vector<16x128xf32> to vector<128xf32>
      %353 = vector.shape_cast %352 : vector<128xf32> to vector<1x128xf32>
      %354 = vector.broadcast %353 : vector<1x128xf32> to vector<16x128xf32>
      %355 = arith.subf %351, %354 : vector<16x128xf32>
      %356 = math.exp2 %355 : vector<16x128xf32>
      %cst_95 = arith.constant dense<0.000000e+00> : vector<128xf32>
      %357 = vector.multi_reduction <add>, %356, %cst_95 [0] : vector<16x128xf32> to vector<128xf32>
      %358 = vector.shape_cast %357 : vector<128xf32> to vector<1x128xf32>
      %359 = math.log %358 : vector<1x128xf32>
      %cst_96 = arith.constant 2.000000e+00 : f32
      %360 = math.log %cst_96 : f32
      %361 = vector.broadcast %360 : f32 to vector<1x128xf32>
      %362 = arith.divf %359, %361 : vector<1x128xf32>
      %363 = arith.addf %353, %362 : vector<1x128xf32>
      %364 = arith.subf %70, %363 : vector<1x128xf32>
      %365 = vector.broadcast %cst_29 : f32 to vector<1x128xf32>
      %366 = arith.select %60, %364, %365 : vector<1x128xi1>, vector<1x128xf32>
      %c8_i32_97 = arith.constant 8 : i32
      %367 = vector.broadcast %366 : vector<1x128xf32> to vector<16x128xf32>
      %368 = arith.subf %367, %94 : vector<16x128xf32>
      %cst_98 = arith.constant dense<0xFF800000> : vector<16xf32>
      %369 = vector.multi_reduction <maximumf>, %368, %cst_98 [1] : vector<16x128xf32> to vector<16xf32>
      %370 = vector.shape_cast %369 : vector<16xf32> to vector<16x1xf32>
      %371 = vector.broadcast %370 : vector<16x1xf32> to vector<16x128xf32>
      %372 = arith.subf %368, %371 : vector<16x128xf32>
      %373 = math.exp2 %372 : vector<16x128xf32>
      %cst_99 = arith.constant dense<0.000000e+00> : vector<16xf32>
      %374 = vector.multi_reduction <add>, %373, %cst_99 [1] : vector<16x128xf32> to vector<16xf32>
      %375 = vector.shape_cast %374 : vector<16xf32> to vector<16x1xf32>
      %376 = math.log %375 : vector<16x1xf32>
      %cst_100 = arith.constant 2.000000e+00 : f32
      %377 = math.log %cst_100 : f32
      %378 = vector.broadcast %377 : f32 to vector<16x1xf32>
      %379 = arith.divf %376, %378 : vector<16x1xf32>
      %380 = arith.addf %370, %379 : vector<16x1xf32>
      %381 = arith.subf %65, %380 : vector<16x1xf32>
      %382 = vector.broadcast %cst_29 : f32 to vector<16x1xf32>
      %383 = arith.select %58, %381, %382 : vector<16x1xi1>, vector<16x1xf32>
      %384 = vector.broadcast %383 : vector<16x1xf32> to vector<16x128xf32>
      %385 = arith.subf %384, %94 : vector<16x128xf32>
      %cst_101 = arith.constant dense<0xFF800000> : vector<128xf32>
      %386 = vector.multi_reduction <maximumf>, %385, %cst_101 [0] : vector<16x128xf32> to vector<128xf32>
      %387 = vector.shape_cast %386 : vector<128xf32> to vector<1x128xf32>
      %388 = vector.broadcast %387 : vector<1x128xf32> to vector<16x128xf32>
      %389 = arith.subf %385, %388 : vector<16x128xf32>
      %390 = math.exp2 %389 : vector<16x128xf32>
      %cst_102 = arith.constant dense<0.000000e+00> : vector<128xf32>
      %391 = vector.multi_reduction <add>, %390, %cst_102 [0] : vector<16x128xf32> to vector<128xf32>
      %392 = vector.shape_cast %391 : vector<128xf32> to vector<1x128xf32>
      %393 = math.log %392 : vector<1x128xf32>
      %cst_103 = arith.constant 2.000000e+00 : f32
      %394 = math.log %cst_103 : f32
      %395 = vector.broadcast %394 : f32 to vector<1x128xf32>
      %396 = arith.divf %393, %395 : vector<1x128xf32>
      %397 = arith.addf %387, %396 : vector<1x128xf32>
      %398 = arith.subf %70, %397 : vector<1x128xf32>
      %399 = vector.broadcast %cst_29 : f32 to vector<1x128xf32>
      %400 = arith.select %60, %398, %399 : vector<1x128xi1>, vector<1x128xf32>
      %c9_i32 = arith.constant 9 : i32
      %401 = vector.broadcast %400 : vector<1x128xf32> to vector<16x128xf32>
      %402 = arith.subf %401, %94 : vector<16x128xf32>
      %cst_104 = arith.constant dense<0xFF800000> : vector<16xf32>
      %403 = vector.multi_reduction <maximumf>, %402, %cst_104 [1] : vector<16x128xf32> to vector<16xf32>
      %404 = vector.shape_cast %403 : vector<16xf32> to vector<16x1xf32>
      %405 = vector.broadcast %404 : vector<16x1xf32> to vector<16x128xf32>
      %406 = arith.subf %402, %405 : vector<16x128xf32>
      %407 = math.exp2 %406 : vector<16x128xf32>
      %cst_105 = arith.constant dense<0.000000e+00> : vector<16xf32>
      %408 = vector.multi_reduction <add>, %407, %cst_105 [1] : vector<16x128xf32> to vector<16xf32>
      %409 = vector.shape_cast %408 : vector<16xf32> to vector<16x1xf32>
      %410 = math.log %409 : vector<16x1xf32>
      %cst_106 = arith.constant 2.000000e+00 : f32
      %411 = math.log %cst_106 : f32
      %412 = vector.broadcast %411 : f32 to vector<16x1xf32>
      %413 = arith.divf %410, %412 : vector<16x1xf32>
      %414 = arith.addf %404, %413 : vector<16x1xf32>
      %415 = arith.subf %65, %414 : vector<16x1xf32>
      %416 = vector.broadcast %cst_29 : f32 to vector<16x1xf32>
      %417 = arith.select %58, %415, %416 : vector<16x1xi1>, vector<16x1xf32>
      %418 = vector.broadcast %417 : vector<16x1xf32> to vector<16x128xf32>
      %419 = arith.subf %418, %94 : vector<16x128xf32>
      %cst_107 = arith.constant dense<0xFF800000> : vector<128xf32>
      %420 = vector.multi_reduction <maximumf>, %419, %cst_107 [0] : vector<16x128xf32> to vector<128xf32>
      %421 = vector.shape_cast %420 : vector<128xf32> to vector<1x128xf32>
      %422 = vector.broadcast %421 : vector<1x128xf32> to vector<16x128xf32>
      %423 = arith.subf %419, %422 : vector<16x128xf32>
      %424 = math.exp2 %423 : vector<16x128xf32>
      %cst_108 = arith.constant dense<0.000000e+00> : vector<128xf32>
      %425 = vector.multi_reduction <add>, %424, %cst_108 [0] : vector<16x128xf32> to vector<128xf32>
      %426 = vector.shape_cast %425 : vector<128xf32> to vector<1x128xf32>
      %427 = math.log %426 : vector<1x128xf32>
      %cst_109 = arith.constant 2.000000e+00 : f32
      %428 = math.log %cst_109 : f32
      %429 = vector.broadcast %428 : f32 to vector<1x128xf32>
      %430 = arith.divf %427, %429 : vector<1x128xf32>
      %431 = arith.addf %421, %430 : vector<1x128xf32>
      %432 = arith.subf %70, %431 : vector<1x128xf32>
      %433 = vector.broadcast %cst_29 : f32 to vector<1x128xf32>
      %434 = arith.select %60, %432, %433 : vector<1x128xi1>, vector<1x128xf32>
      %c10_i32 = arith.constant 10 : i32
      %435 = vector.broadcast %434 : vector<1x128xf32> to vector<16x128xf32>
      %436 = arith.subf %435, %94 : vector<16x128xf32>
      %cst_110 = arith.constant dense<0xFF800000> : vector<16xf32>
      %437 = vector.multi_reduction <maximumf>, %436, %cst_110 [1] : vector<16x128xf32> to vector<16xf32>
      %438 = vector.shape_cast %437 : vector<16xf32> to vector<16x1xf32>
      %439 = vector.broadcast %438 : vector<16x1xf32> to vector<16x128xf32>
      %440 = arith.subf %436, %439 : vector<16x128xf32>
      %441 = math.exp2 %440 : vector<16x128xf32>
      %cst_111 = arith.constant dense<0.000000e+00> : vector<16xf32>
      %442 = vector.multi_reduction <add>, %441, %cst_111 [1] : vector<16x128xf32> to vector<16xf32>
      %443 = vector.shape_cast %442 : vector<16xf32> to vector<16x1xf32>
      %444 = math.log %443 : vector<16x1xf32>
      %cst_112 = arith.constant 2.000000e+00 : f32
      %445 = math.log %cst_112 : f32
      %446 = vector.broadcast %445 : f32 to vector<16x1xf32>
      %447 = arith.divf %444, %446 : vector<16x1xf32>
      %448 = arith.addf %438, %447 : vector<16x1xf32>
      %449 = arith.subf %65, %448 : vector<16x1xf32>
      %450 = vector.broadcast %cst_29 : f32 to vector<16x1xf32>
      %451 = arith.select %58, %449, %450 : vector<16x1xi1>, vector<16x1xf32>
      %452 = vector.broadcast %451 : vector<16x1xf32> to vector<16x128xf32>
      %453 = arith.subf %452, %94 : vector<16x128xf32>
      %cst_113 = arith.constant dense<0xFF800000> : vector<128xf32>
      %454 = vector.multi_reduction <maximumf>, %453, %cst_113 [0] : vector<16x128xf32> to vector<128xf32>
      %455 = vector.shape_cast %454 : vector<128xf32> to vector<1x128xf32>
      %456 = vector.broadcast %455 : vector<1x128xf32> to vector<16x128xf32>
      %457 = arith.subf %453, %456 : vector<16x128xf32>
      %458 = math.exp2 %457 : vector<16x128xf32>
      %cst_114 = arith.constant dense<0.000000e+00> : vector<128xf32>
      %459 = vector.multi_reduction <add>, %458, %cst_114 [0] : vector<16x128xf32> to vector<128xf32>
      %460 = vector.shape_cast %459 : vector<128xf32> to vector<1x128xf32>
      %461 = math.log %460 : vector<1x128xf32>
      %cst_115 = arith.constant 2.000000e+00 : f32
      %462 = math.log %cst_115 : f32
      %463 = vector.broadcast %462 : f32 to vector<1x128xf32>
      %464 = arith.divf %461, %463 : vector<1x128xf32>
      %465 = arith.addf %455, %464 : vector<1x128xf32>
      %466 = arith.subf %70, %465 : vector<1x128xf32>
      %467 = vector.broadcast %cst_29 : f32 to vector<1x128xf32>
      %468 = arith.select %60, %466, %467 : vector<1x128xi1>, vector<1x128xf32>
      %c11_i32 = arith.constant 11 : i32
      %469 = vector.broadcast %468 : vector<1x128xf32> to vector<16x128xf32>
      %470 = arith.subf %469, %94 : vector<16x128xf32>
      %cst_116 = arith.constant dense<0xFF800000> : vector<16xf32>
      %471 = vector.multi_reduction <maximumf>, %470, %cst_116 [1] : vector<16x128xf32> to vector<16xf32>
      %472 = vector.shape_cast %471 : vector<16xf32> to vector<16x1xf32>
      %473 = vector.broadcast %472 : vector<16x1xf32> to vector<16x128xf32>
      %474 = arith.subf %470, %473 : vector<16x128xf32>
      %475 = math.exp2 %474 : vector<16x128xf32>
      %cst_117 = arith.constant dense<0.000000e+00> : vector<16xf32>
      %476 = vector.multi_reduction <add>, %475, %cst_117 [1] : vector<16x128xf32> to vector<16xf32>
      %477 = vector.shape_cast %476 : vector<16xf32> to vector<16x1xf32>
      %478 = math.log %477 : vector<16x1xf32>
      %cst_118 = arith.constant 2.000000e+00 : f32
      %479 = math.log %cst_118 : f32
      %480 = vector.broadcast %479 : f32 to vector<16x1xf32>
      %481 = arith.divf %478, %480 : vector<16x1xf32>
      %482 = arith.addf %472, %481 : vector<16x1xf32>
      %483 = arith.subf %65, %482 : vector<16x1xf32>
      %484 = vector.broadcast %cst_29 : f32 to vector<16x1xf32>
      %485 = arith.select %58, %483, %484 : vector<16x1xi1>, vector<16x1xf32>
      %486 = vector.broadcast %485 : vector<16x1xf32> to vector<16x128xf32>
      %487 = arith.subf %486, %94 : vector<16x128xf32>
      %cst_119 = arith.constant dense<0xFF800000> : vector<128xf32>
      %488 = vector.multi_reduction <maximumf>, %487, %cst_119 [0] : vector<16x128xf32> to vector<128xf32>
      %489 = vector.shape_cast %488 : vector<128xf32> to vector<1x128xf32>
      %490 = vector.broadcast %489 : vector<1x128xf32> to vector<16x128xf32>
      %491 = arith.subf %487, %490 : vector<16x128xf32>
      %492 = math.exp2 %491 : vector<16x128xf32>
      %cst_120 = arith.constant dense<0.000000e+00> : vector<128xf32>
      %493 = vector.multi_reduction <add>, %492, %cst_120 [0] : vector<16x128xf32> to vector<128xf32>
      %494 = vector.shape_cast %493 : vector<128xf32> to vector<1x128xf32>
      %495 = math.log %494 : vector<1x128xf32>
      %cst_121 = arith.constant 2.000000e+00 : f32
      %496 = math.log %cst_121 : f32
      %497 = vector.broadcast %496 : f32 to vector<1x128xf32>
      %498 = arith.divf %495, %497 : vector<1x128xf32>
      %499 = arith.addf %489, %498 : vector<1x128xf32>
      %500 = arith.subf %70, %499 : vector<1x128xf32>
      %501 = vector.broadcast %cst_29 : f32 to vector<1x128xf32>
      %502 = arith.select %60, %500, %501 : vector<1x128xi1>, vector<1x128xf32>
      %c12_i32_122 = arith.constant 12 : i32
      %503 = vector.broadcast %502 : vector<1x128xf32> to vector<16x128xf32>
      %504 = arith.subf %503, %94 : vector<16x128xf32>
      %cst_123 = arith.constant dense<0xFF800000> : vector<16xf32>
      %505 = vector.multi_reduction <maximumf>, %504, %cst_123 [1] : vector<16x128xf32> to vector<16xf32>
      %506 = vector.shape_cast %505 : vector<16xf32> to vector<16x1xf32>
      %507 = vector.broadcast %506 : vector<16x1xf32> to vector<16x128xf32>
      %508 = arith.subf %504, %507 : vector<16x128xf32>
      %509 = math.exp2 %508 : vector<16x128xf32>
      %cst_124 = arith.constant dense<0.000000e+00> : vector<16xf32>
      %510 = vector.multi_reduction <add>, %509, %cst_124 [1] : vector<16x128xf32> to vector<16xf32>
      %511 = vector.shape_cast %510 : vector<16xf32> to vector<16x1xf32>
      %512 = math.log %511 : vector<16x1xf32>
      %cst_125 = arith.constant 2.000000e+00 : f32
      %513 = math.log %cst_125 : f32
      %514 = vector.broadcast %513 : f32 to vector<16x1xf32>
      %515 = arith.divf %512, %514 : vector<16x1xf32>
      %516 = arith.addf %506, %515 : vector<16x1xf32>
      %517 = arith.subf %65, %516 : vector<16x1xf32>
      %518 = vector.broadcast %cst_29 : f32 to vector<16x1xf32>
      %519 = arith.select %58, %517, %518 : vector<16x1xi1>, vector<16x1xf32>
      %520 = vector.broadcast %519 : vector<16x1xf32> to vector<16x128xf32>
      %521 = arith.subf %520, %94 : vector<16x128xf32>
      %cst_126 = arith.constant dense<0xFF800000> : vector<128xf32>
      %522 = vector.multi_reduction <maximumf>, %521, %cst_126 [0] : vector<16x128xf32> to vector<128xf32>
      %523 = vector.shape_cast %522 : vector<128xf32> to vector<1x128xf32>
      %524 = vector.broadcast %523 : vector<1x128xf32> to vector<16x128xf32>
      %525 = arith.subf %521, %524 : vector<16x128xf32>
      %526 = math.exp2 %525 : vector<16x128xf32>
      %cst_127 = arith.constant dense<0.000000e+00> : vector<128xf32>
      %527 = vector.multi_reduction <add>, %526, %cst_127 [0] : vector<16x128xf32> to vector<128xf32>
      %528 = vector.shape_cast %527 : vector<128xf32> to vector<1x128xf32>
      %529 = math.log %528 : vector<1x128xf32>
      %cst_128 = arith.constant 2.000000e+00 : f32
      %530 = math.log %cst_128 : f32
      %531 = vector.broadcast %530 : f32 to vector<1x128xf32>
      %532 = arith.divf %529, %531 : vector<1x128xf32>
      %533 = arith.addf %523, %532 : vector<1x128xf32>
      %534 = arith.subf %70, %533 : vector<1x128xf32>
      %535 = vector.broadcast %cst_29 : f32 to vector<1x128xf32>
      %536 = arith.select %60, %534, %535 : vector<1x128xi1>, vector<1x128xf32>
      %c13_i32 = arith.constant 13 : i32
      %537 = vector.broadcast %536 : vector<1x128xf32> to vector<16x128xf32>
      %538 = arith.subf %537, %94 : vector<16x128xf32>
      %cst_129 = arith.constant dense<0xFF800000> : vector<16xf32>
      %539 = vector.multi_reduction <maximumf>, %538, %cst_129 [1] : vector<16x128xf32> to vector<16xf32>
      %540 = vector.shape_cast %539 : vector<16xf32> to vector<16x1xf32>
      %541 = vector.broadcast %540 : vector<16x1xf32> to vector<16x128xf32>
      %542 = arith.subf %538, %541 : vector<16x128xf32>
      %543 = math.exp2 %542 : vector<16x128xf32>
      %cst_130 = arith.constant dense<0.000000e+00> : vector<16xf32>
      %544 = vector.multi_reduction <add>, %543, %cst_130 [1] : vector<16x128xf32> to vector<16xf32>
      %545 = vector.shape_cast %544 : vector<16xf32> to vector<16x1xf32>
      %546 = math.log %545 : vector<16x1xf32>
      %cst_131 = arith.constant 2.000000e+00 : f32
      %547 = math.log %cst_131 : f32
      %548 = vector.broadcast %547 : f32 to vector<16x1xf32>
      %549 = arith.divf %546, %548 : vector<16x1xf32>
      %550 = arith.addf %540, %549 : vector<16x1xf32>
      %551 = arith.subf %65, %550 : vector<16x1xf32>
      %552 = vector.broadcast %cst_29 : f32 to vector<16x1xf32>
      %553 = arith.select %58, %551, %552 : vector<16x1xi1>, vector<16x1xf32>
      %554 = vector.broadcast %553 : vector<16x1xf32> to vector<16x128xf32>
      %555 = arith.subf %554, %94 : vector<16x128xf32>
      %cst_132 = arith.constant dense<0xFF800000> : vector<128xf32>
      %556 = vector.multi_reduction <maximumf>, %555, %cst_132 [0] : vector<16x128xf32> to vector<128xf32>
      %557 = vector.shape_cast %556 : vector<128xf32> to vector<1x128xf32>
      %558 = vector.broadcast %557 : vector<1x128xf32> to vector<16x128xf32>
      %559 = arith.subf %555, %558 : vector<16x128xf32>
      %560 = math.exp2 %559 : vector<16x128xf32>
      %cst_133 = arith.constant dense<0.000000e+00> : vector<128xf32>
      %561 = vector.multi_reduction <add>, %560, %cst_133 [0] : vector<16x128xf32> to vector<128xf32>
      %562 = vector.shape_cast %561 : vector<128xf32> to vector<1x128xf32>
      %563 = math.log %562 : vector<1x128xf32>
      %cst_134 = arith.constant 2.000000e+00 : f32
      %564 = math.log %cst_134 : f32
      %565 = vector.broadcast %564 : f32 to vector<1x128xf32>
      %566 = arith.divf %563, %565 : vector<1x128xf32>
      %567 = arith.addf %557, %566 : vector<1x128xf32>
      %568 = arith.subf %70, %567 : vector<1x128xf32>
      %569 = vector.broadcast %cst_29 : f32 to vector<1x128xf32>
      %570 = arith.select %60, %568, %569 : vector<1x128xi1>, vector<1x128xf32>
      %c14_i32 = arith.constant 14 : i32
      %571 = vector.broadcast %570 : vector<1x128xf32> to vector<16x128xf32>
      %572 = arith.subf %571, %94 : vector<16x128xf32>
      %cst_135 = arith.constant dense<0xFF800000> : vector<16xf32>
      %573 = vector.multi_reduction <maximumf>, %572, %cst_135 [1] : vector<16x128xf32> to vector<16xf32>
      %574 = vector.shape_cast %573 : vector<16xf32> to vector<16x1xf32>
      %575 = vector.broadcast %574 : vector<16x1xf32> to vector<16x128xf32>
      %576 = arith.subf %572, %575 : vector<16x128xf32>
      %577 = math.exp2 %576 : vector<16x128xf32>
      %cst_136 = arith.constant dense<0.000000e+00> : vector<16xf32>
      %578 = vector.multi_reduction <add>, %577, %cst_136 [1] : vector<16x128xf32> to vector<16xf32>
      %579 = vector.shape_cast %578 : vector<16xf32> to vector<16x1xf32>
      %580 = math.log %579 : vector<16x1xf32>
      %cst_137 = arith.constant 2.000000e+00 : f32
      %581 = math.log %cst_137 : f32
      %582 = vector.broadcast %581 : f32 to vector<16x1xf32>
      %583 = arith.divf %580, %582 : vector<16x1xf32>
      %584 = arith.addf %574, %583 : vector<16x1xf32>
      %585 = arith.subf %65, %584 : vector<16x1xf32>
      %586 = vector.broadcast %cst_29 : f32 to vector<16x1xf32>
      %587 = arith.select %58, %585, %586 : vector<16x1xi1>, vector<16x1xf32>
      %588 = vector.broadcast %587 : vector<16x1xf32> to vector<16x128xf32>
      %589 = arith.subf %588, %94 : vector<16x128xf32>
      %cst_138 = arith.constant dense<0xFF800000> : vector<128xf32>
      %590 = vector.multi_reduction <maximumf>, %589, %cst_138 [0] : vector<16x128xf32> to vector<128xf32>
      %591 = vector.shape_cast %590 : vector<128xf32> to vector<1x128xf32>
      %592 = vector.broadcast %591 : vector<1x128xf32> to vector<16x128xf32>
      %593 = arith.subf %589, %592 : vector<16x128xf32>
      %594 = math.exp2 %593 : vector<16x128xf32>
      %cst_139 = arith.constant dense<0.000000e+00> : vector<128xf32>
      %595 = vector.multi_reduction <add>, %594, %cst_139 [0] : vector<16x128xf32> to vector<128xf32>
      %596 = vector.shape_cast %595 : vector<128xf32> to vector<1x128xf32>
      %597 = math.log %596 : vector<1x128xf32>
      %cst_140 = arith.constant 2.000000e+00 : f32
      %598 = math.log %cst_140 : f32
      %599 = vector.broadcast %598 : f32 to vector<1x128xf32>
      %600 = arith.divf %597, %599 : vector<1x128xf32>
      %601 = arith.addf %591, %600 : vector<1x128xf32>
      %602 = arith.subf %70, %601 : vector<1x128xf32>
      %603 = vector.broadcast %cst_29 : f32 to vector<1x128xf32>
      %604 = arith.select %60, %602, %603 : vector<1x128xi1>, vector<1x128xf32>
      %c15_i32 = arith.constant 15 : i32
      %605 = vector.broadcast %604 : vector<1x128xf32> to vector<16x128xf32>
      %606 = arith.subf %605, %94 : vector<16x128xf32>
      %cst_141 = arith.constant dense<0xFF800000> : vector<16xf32>
      %607 = vector.multi_reduction <maximumf>, %606, %cst_141 [1] : vector<16x128xf32> to vector<16xf32>
      %608 = vector.shape_cast %607 : vector<16xf32> to vector<16x1xf32>
      %609 = vector.broadcast %608 : vector<16x1xf32> to vector<16x128xf32>
      %610 = arith.subf %606, %609 : vector<16x128xf32>
      %611 = math.exp2 %610 : vector<16x128xf32>
      %cst_142 = arith.constant dense<0.000000e+00> : vector<16xf32>
      %612 = vector.multi_reduction <add>, %611, %cst_142 [1] : vector<16x128xf32> to vector<16xf32>
      %613 = vector.shape_cast %612 : vector<16xf32> to vector<16x1xf32>
      %614 = math.log %613 : vector<16x1xf32>
      %cst_143 = arith.constant 2.000000e+00 : f32
      %615 = math.log %cst_143 : f32
      %616 = vector.broadcast %615 : f32 to vector<16x1xf32>
      %617 = arith.divf %614, %616 : vector<16x1xf32>
      %618 = arith.addf %608, %617 : vector<16x1xf32>
      %619 = arith.subf %65, %618 : vector<16x1xf32>
      %620 = vector.broadcast %cst_29 : f32 to vector<16x1xf32>
      %621 = arith.select %58, %619, %620 : vector<16x1xi1>, vector<16x1xf32>
      %622 = vector.broadcast %621 : vector<16x1xf32> to vector<16x128xf32>
      %623 = arith.subf %622, %94 : vector<16x128xf32>
      %cst_144 = arith.constant dense<0xFF800000> : vector<128xf32>
      %624 = vector.multi_reduction <maximumf>, %623, %cst_144 [0] : vector<16x128xf32> to vector<128xf32>
      %625 = vector.shape_cast %624 : vector<128xf32> to vector<1x128xf32>
      %626 = vector.broadcast %625 : vector<1x128xf32> to vector<16x128xf32>
      %627 = arith.subf %623, %626 : vector<16x128xf32>
      %628 = math.exp2 %627 : vector<16x128xf32>
      %cst_145 = arith.constant dense<0.000000e+00> : vector<128xf32>
      %629 = vector.multi_reduction <add>, %628, %cst_145 [0] : vector<16x128xf32> to vector<128xf32>
      %630 = vector.shape_cast %629 : vector<128xf32> to vector<1x128xf32>
      %631 = math.log %630 : vector<1x128xf32>
      %cst_146 = arith.constant 2.000000e+00 : f32
      %632 = math.log %cst_146 : f32
      %633 = vector.broadcast %632 : f32 to vector<1x128xf32>
      %634 = arith.divf %631, %633 : vector<1x128xf32>
      %635 = arith.addf %625, %634 : vector<1x128xf32>
      %636 = arith.subf %70, %635 : vector<1x128xf32>
      %637 = vector.broadcast %cst_29 : f32 to vector<1x128xf32>
      %638 = arith.select %60, %636, %637 : vector<1x128xi1>, vector<1x128xf32>
      %c16_i32 = arith.constant 16 : i32
      %639 = vector.broadcast %638 : vector<1x128xf32> to vector<16x128xf32>
      %640 = arith.subf %639, %94 : vector<16x128xf32>
      %cst_147 = arith.constant dense<0xFF800000> : vector<16xf32>
      %641 = vector.multi_reduction <maximumf>, %640, %cst_147 [1] : vector<16x128xf32> to vector<16xf32>
      %642 = vector.shape_cast %641 : vector<16xf32> to vector<16x1xf32>
      %643 = vector.broadcast %642 : vector<16x1xf32> to vector<16x128xf32>
      %644 = arith.subf %640, %643 : vector<16x128xf32>
      %645 = math.exp2 %644 : vector<16x128xf32>
      %cst_148 = arith.constant dense<0.000000e+00> : vector<16xf32>
      %646 = vector.multi_reduction <add>, %645, %cst_148 [1] : vector<16x128xf32> to vector<16xf32>
      %647 = vector.shape_cast %646 : vector<16xf32> to vector<16x1xf32>
      %648 = math.log %647 : vector<16x1xf32>
      %cst_149 = arith.constant 2.000000e+00 : f32
      %649 = math.log %cst_149 : f32
      %650 = vector.broadcast %649 : f32 to vector<16x1xf32>
      %651 = arith.divf %648, %650 : vector<16x1xf32>
      %652 = arith.addf %642, %651 : vector<16x1xf32>
      %653 = arith.subf %65, %652 : vector<16x1xf32>
      %654 = vector.broadcast %cst_29 : f32 to vector<16x1xf32>
      %655 = arith.select %58, %653, %654 : vector<16x1xi1>, vector<16x1xf32>
      %656 = vector.broadcast %655 : vector<16x1xf32> to vector<16x128xf32>
      %657 = arith.subf %656, %94 : vector<16x128xf32>
      %cst_150 = arith.constant dense<0xFF800000> : vector<128xf32>
      %658 = vector.multi_reduction <maximumf>, %657, %cst_150 [0] : vector<16x128xf32> to vector<128xf32>
      %659 = vector.shape_cast %658 : vector<128xf32> to vector<1x128xf32>
      %660 = vector.broadcast %659 : vector<1x128xf32> to vector<16x128xf32>
      %661 = arith.subf %657, %660 : vector<16x128xf32>
      %662 = math.exp2 %661 : vector<16x128xf32>
      %cst_151 = arith.constant dense<0.000000e+00> : vector<128xf32>
      %663 = vector.multi_reduction <add>, %662, %cst_151 [0] : vector<16x128xf32> to vector<128xf32>
      %664 = vector.shape_cast %663 : vector<128xf32> to vector<1x128xf32>
      %665 = math.log %664 : vector<1x128xf32>
      %cst_152 = arith.constant 2.000000e+00 : f32
      %666 = math.log %cst_152 : f32
      %667 = vector.broadcast %666 : f32 to vector<1x128xf32>
      %668 = arith.divf %665, %667 : vector<1x128xf32>
      %669 = arith.addf %659, %668 : vector<1x128xf32>
      %670 = arith.subf %70, %669 : vector<1x128xf32>
      %671 = vector.broadcast %cst_29 : f32 to vector<1x128xf32>
      %672 = arith.select %60, %670, %671 : vector<1x128xi1>, vector<1x128xf32>
      %c17_i32 = arith.constant 17 : i32
      %673 = vector.broadcast %672 : vector<1x128xf32> to vector<16x128xf32>
      %674 = arith.subf %673, %94 : vector<16x128xf32>
      %cst_153 = arith.constant dense<0xFF800000> : vector<16xf32>
      %675 = vector.multi_reduction <maximumf>, %674, %cst_153 [1] : vector<16x128xf32> to vector<16xf32>
      %676 = vector.shape_cast %675 : vector<16xf32> to vector<16x1xf32>
      %677 = vector.broadcast %676 : vector<16x1xf32> to vector<16x128xf32>
      %678 = arith.subf %674, %677 : vector<16x128xf32>
      %679 = math.exp2 %678 : vector<16x128xf32>
      %cst_154 = arith.constant dense<0.000000e+00> : vector<16xf32>
      %680 = vector.multi_reduction <add>, %679, %cst_154 [1] : vector<16x128xf32> to vector<16xf32>
      %681 = vector.shape_cast %680 : vector<16xf32> to vector<16x1xf32>
      %682 = math.log %681 : vector<16x1xf32>
      %cst_155 = arith.constant 2.000000e+00 : f32
      %683 = math.log %cst_155 : f32
      %684 = vector.broadcast %683 : f32 to vector<16x1xf32>
      %685 = arith.divf %682, %684 : vector<16x1xf32>
      %686 = arith.addf %676, %685 : vector<16x1xf32>
      %687 = arith.subf %65, %686 : vector<16x1xf32>
      %688 = vector.broadcast %cst_29 : f32 to vector<16x1xf32>
      %689 = arith.select %58, %687, %688 : vector<16x1xi1>, vector<16x1xf32>
      %690 = vector.broadcast %689 : vector<16x1xf32> to vector<16x128xf32>
      %691 = arith.subf %690, %94 : vector<16x128xf32>
      %cst_156 = arith.constant dense<0xFF800000> : vector<128xf32>
      %692 = vector.multi_reduction <maximumf>, %691, %cst_156 [0] : vector<16x128xf32> to vector<128xf32>
      %693 = vector.shape_cast %692 : vector<128xf32> to vector<1x128xf32>
      %694 = vector.broadcast %693 : vector<1x128xf32> to vector<16x128xf32>
      %695 = arith.subf %691, %694 : vector<16x128xf32>
      %696 = math.exp2 %695 : vector<16x128xf32>
      %cst_157 = arith.constant dense<0.000000e+00> : vector<128xf32>
      %697 = vector.multi_reduction <add>, %696, %cst_157 [0] : vector<16x128xf32> to vector<128xf32>
      %698 = vector.shape_cast %697 : vector<128xf32> to vector<1x128xf32>
      %699 = math.log %698 : vector<1x128xf32>
      %cst_158 = arith.constant 2.000000e+00 : f32
      %700 = math.log %cst_158 : f32
      %701 = vector.broadcast %700 : f32 to vector<1x128xf32>
      %702 = arith.divf %699, %701 : vector<1x128xf32>
      %703 = arith.addf %693, %702 : vector<1x128xf32>
      %704 = arith.subf %70, %703 : vector<1x128xf32>
      %705 = vector.broadcast %cst_29 : f32 to vector<1x128xf32>
      %706 = arith.select %60, %704, %705 : vector<1x128xi1>, vector<1x128xf32>
      %c18_i32 = arith.constant 18 : i32
      %707 = vector.broadcast %706 : vector<1x128xf32> to vector<16x128xf32>
      %708 = arith.subf %707, %94 : vector<16x128xf32>
      %cst_159 = arith.constant dense<0xFF800000> : vector<16xf32>
      %709 = vector.multi_reduction <maximumf>, %708, %cst_159 [1] : vector<16x128xf32> to vector<16xf32>
      %710 = vector.shape_cast %709 : vector<16xf32> to vector<16x1xf32>
      %711 = vector.broadcast %710 : vector<16x1xf32> to vector<16x128xf32>
      %712 = arith.subf %708, %711 : vector<16x128xf32>
      %713 = math.exp2 %712 : vector<16x128xf32>
      %cst_160 = arith.constant dense<0.000000e+00> : vector<16xf32>
      %714 = vector.multi_reduction <add>, %713, %cst_160 [1] : vector<16x128xf32> to vector<16xf32>
      %715 = vector.shape_cast %714 : vector<16xf32> to vector<16x1xf32>
      %716 = math.log %715 : vector<16x1xf32>
      %cst_161 = arith.constant 2.000000e+00 : f32
      %717 = math.log %cst_161 : f32
      %718 = vector.broadcast %717 : f32 to vector<16x1xf32>
      %719 = arith.divf %716, %718 : vector<16x1xf32>
      %720 = arith.addf %710, %719 : vector<16x1xf32>
      %721 = arith.subf %65, %720 : vector<16x1xf32>
      %722 = vector.broadcast %cst_29 : f32 to vector<16x1xf32>
      %723 = arith.select %58, %721, %722 : vector<16x1xi1>, vector<16x1xf32>
      %724 = vector.broadcast %723 : vector<16x1xf32> to vector<16x128xf32>
      %725 = arith.subf %724, %94 : vector<16x128xf32>
      %cst_162 = arith.constant dense<0xFF800000> : vector<128xf32>
      %726 = vector.multi_reduction <maximumf>, %725, %cst_162 [0] : vector<16x128xf32> to vector<128xf32>
      %727 = vector.shape_cast %726 : vector<128xf32> to vector<1x128xf32>
      %728 = vector.broadcast %727 : vector<1x128xf32> to vector<16x128xf32>
      %729 = arith.subf %725, %728 : vector<16x128xf32>
      %730 = math.exp2 %729 : vector<16x128xf32>
      %cst_163 = arith.constant dense<0.000000e+00> : vector<128xf32>
      %731 = vector.multi_reduction <add>, %730, %cst_163 [0] : vector<16x128xf32> to vector<128xf32>
      %732 = vector.shape_cast %731 : vector<128xf32> to vector<1x128xf32>
      %733 = math.log %732 : vector<1x128xf32>
      %cst_164 = arith.constant 2.000000e+00 : f32
      %734 = math.log %cst_164 : f32
      %735 = vector.broadcast %734 : f32 to vector<1x128xf32>
      %736 = arith.divf %733, %735 : vector<1x128xf32>
      %737 = arith.addf %727, %736 : vector<1x128xf32>
      %738 = arith.subf %70, %737 : vector<1x128xf32>
      %739 = vector.broadcast %cst_29 : f32 to vector<1x128xf32>
      %740 = arith.select %60, %738, %739 : vector<1x128xi1>, vector<1x128xf32>
      %c19_i32 = arith.constant 19 : i32
      %741 = vector.broadcast %740 : vector<1x128xf32> to vector<16x128xf32>
      %742 = arith.subf %741, %94 : vector<16x128xf32>
      %cst_165 = arith.constant dense<0xFF800000> : vector<16xf32>
      %743 = vector.multi_reduction <maximumf>, %742, %cst_165 [1] : vector<16x128xf32> to vector<16xf32>
      %744 = vector.shape_cast %743 : vector<16xf32> to vector<16x1xf32>
      %745 = vector.broadcast %744 : vector<16x1xf32> to vector<16x128xf32>
      %746 = arith.subf %742, %745 : vector<16x128xf32>
      %747 = math.exp2 %746 : vector<16x128xf32>
      %cst_166 = arith.constant dense<0.000000e+00> : vector<16xf32>
      %748 = vector.multi_reduction <add>, %747, %cst_166 [1] : vector<16x128xf32> to vector<16xf32>
      %749 = vector.shape_cast %748 : vector<16xf32> to vector<16x1xf32>
      %750 = math.log %749 : vector<16x1xf32>
      %cst_167 = arith.constant 2.000000e+00 : f32
      %751 = math.log %cst_167 : f32
      %752 = vector.broadcast %751 : f32 to vector<16x1xf32>
      %753 = arith.divf %750, %752 : vector<16x1xf32>
      %754 = arith.addf %744, %753 : vector<16x1xf32>
      %755 = arith.subf %65, %754 : vector<16x1xf32>
      %756 = vector.broadcast %cst_29 : f32 to vector<16x1xf32>
      %757 = arith.select %58, %755, %756 : vector<16x1xi1>, vector<16x1xf32>
      %758 = vector.broadcast %757 : vector<16x1xf32> to vector<16x128xf32>
      %759 = arith.subf %758, %94 : vector<16x128xf32>
      %cst_168 = arith.constant dense<0xFF800000> : vector<128xf32>
      %760 = vector.multi_reduction <maximumf>, %759, %cst_168 [0] : vector<16x128xf32> to vector<128xf32>
      %761 = vector.shape_cast %760 : vector<128xf32> to vector<1x128xf32>
      %762 = vector.broadcast %761 : vector<1x128xf32> to vector<16x128xf32>
      %763 = arith.subf %759, %762 : vector<16x128xf32>
      %764 = math.exp2 %763 : vector<16x128xf32>
      %cst_169 = arith.constant dense<0.000000e+00> : vector<128xf32>
      %765 = vector.multi_reduction <add>, %764, %cst_169 [0] : vector<16x128xf32> to vector<128xf32>
      %766 = vector.shape_cast %765 : vector<128xf32> to vector<1x128xf32>
      %767 = math.log %766 : vector<1x128xf32>
      %cst_170 = arith.constant 2.000000e+00 : f32
      %768 = math.log %cst_170 : f32
      %769 = vector.broadcast %768 : f32 to vector<1x128xf32>
      %770 = arith.divf %767, %769 : vector<1x128xf32>
      %771 = arith.addf %761, %770 : vector<1x128xf32>
      %772 = arith.subf %70, %771 : vector<1x128xf32>
      %773 = vector.broadcast %cst_29 : f32 to vector<1x128xf32>
      %774 = arith.select %60, %772, %773 : vector<1x128xi1>, vector<1x128xf32>
      %c20_i32 = arith.constant 20 : i32
      %775 = vector.broadcast %774 : vector<1x128xf32> to vector<16x128xf32>
      %776 = arith.subf %775, %94 : vector<16x128xf32>
      %cst_171 = arith.constant dense<0xFF800000> : vector<16xf32>
      %777 = vector.multi_reduction <maximumf>, %776, %cst_171 [1] : vector<16x128xf32> to vector<16xf32>
      %778 = vector.shape_cast %777 : vector<16xf32> to vector<16x1xf32>
      %779 = vector.broadcast %778 : vector<16x1xf32> to vector<16x128xf32>
      %780 = arith.subf %776, %779 : vector<16x128xf32>
      %781 = math.exp2 %780 : vector<16x128xf32>
      %cst_172 = arith.constant dense<0.000000e+00> : vector<16xf32>
      %782 = vector.multi_reduction <add>, %781, %cst_172 [1] : vector<16x128xf32> to vector<16xf32>
      %783 = vector.shape_cast %782 : vector<16xf32> to vector<16x1xf32>
      %784 = math.log %783 : vector<16x1xf32>
      %cst_173 = arith.constant 2.000000e+00 : f32
      %785 = math.log %cst_173 : f32
      %786 = vector.broadcast %785 : f32 to vector<16x1xf32>
      %787 = arith.divf %784, %786 : vector<16x1xf32>
      %788 = arith.addf %778, %787 : vector<16x1xf32>
      %789 = arith.subf %65, %788 : vector<16x1xf32>
      %790 = vector.broadcast %cst_29 : f32 to vector<16x1xf32>
      %791 = arith.select %58, %789, %790 : vector<16x1xi1>, vector<16x1xf32>
      %792 = vector.broadcast %791 : vector<16x1xf32> to vector<16x128xf32>
      %793 = arith.subf %792, %94 : vector<16x128xf32>
      %cst_174 = arith.constant dense<0xFF800000> : vector<128xf32>
      %794 = vector.multi_reduction <maximumf>, %793, %cst_174 [0] : vector<16x128xf32> to vector<128xf32>
      %795 = vector.shape_cast %794 : vector<128xf32> to vector<1x128xf32>
      %796 = vector.broadcast %795 : vector<1x128xf32> to vector<16x128xf32>
      %797 = arith.subf %793, %796 : vector<16x128xf32>
      %798 = math.exp2 %797 : vector<16x128xf32>
      %cst_175 = arith.constant dense<0.000000e+00> : vector<128xf32>
      %799 = vector.multi_reduction <add>, %798, %cst_175 [0] : vector<16x128xf32> to vector<128xf32>
      %800 = vector.shape_cast %799 : vector<128xf32> to vector<1x128xf32>
      %801 = math.log %800 : vector<1x128xf32>
      %cst_176 = arith.constant 2.000000e+00 : f32
      %802 = math.log %cst_176 : f32
      %803 = vector.broadcast %802 : f32 to vector<1x128xf32>
      %804 = arith.divf %801, %803 : vector<1x128xf32>
      %805 = arith.addf %795, %804 : vector<1x128xf32>
      %806 = arith.subf %70, %805 : vector<1x128xf32>
      %807 = vector.broadcast %cst_29 : f32 to vector<1x128xf32>
      %808 = arith.select %60, %806, %807 : vector<1x128xi1>, vector<1x128xf32>
      %c21_i32 = arith.constant 21 : i32
      %809 = vector.broadcast %808 : vector<1x128xf32> to vector<16x128xf32>
      %810 = arith.subf %809, %94 : vector<16x128xf32>
      %cst_177 = arith.constant dense<0xFF800000> : vector<16xf32>
      %811 = vector.multi_reduction <maximumf>, %810, %cst_177 [1] : vector<16x128xf32> to vector<16xf32>
      %812 = vector.shape_cast %811 : vector<16xf32> to vector<16x1xf32>
      %813 = vector.broadcast %812 : vector<16x1xf32> to vector<16x128xf32>
      %814 = arith.subf %810, %813 : vector<16x128xf32>
      %815 = math.exp2 %814 : vector<16x128xf32>
      %cst_178 = arith.constant dense<0.000000e+00> : vector<16xf32>
      %816 = vector.multi_reduction <add>, %815, %cst_178 [1] : vector<16x128xf32> to vector<16xf32>
      %817 = vector.shape_cast %816 : vector<16xf32> to vector<16x1xf32>
      %818 = math.log %817 : vector<16x1xf32>
      %cst_179 = arith.constant 2.000000e+00 : f32
      %819 = math.log %cst_179 : f32
      %820 = vector.broadcast %819 : f32 to vector<16x1xf32>
      %821 = arith.divf %818, %820 : vector<16x1xf32>
      %822 = arith.addf %812, %821 : vector<16x1xf32>
      %823 = arith.subf %65, %822 : vector<16x1xf32>
      %824 = vector.broadcast %cst_29 : f32 to vector<16x1xf32>
      %825 = arith.select %58, %823, %824 : vector<16x1xi1>, vector<16x1xf32>
      %826 = vector.broadcast %825 : vector<16x1xf32> to vector<16x128xf32>
      %827 = arith.subf %826, %94 : vector<16x128xf32>
      %cst_180 = arith.constant dense<0xFF800000> : vector<128xf32>
      %828 = vector.multi_reduction <maximumf>, %827, %cst_180 [0] : vector<16x128xf32> to vector<128xf32>
      %829 = vector.shape_cast %828 : vector<128xf32> to vector<1x128xf32>
      %830 = vector.broadcast %829 : vector<1x128xf32> to vector<16x128xf32>
      %831 = arith.subf %827, %830 : vector<16x128xf32>
      %832 = math.exp2 %831 : vector<16x128xf32>
      %cst_181 = arith.constant dense<0.000000e+00> : vector<128xf32>
      %833 = vector.multi_reduction <add>, %832, %cst_181 [0] : vector<16x128xf32> to vector<128xf32>
      %834 = vector.shape_cast %833 : vector<128xf32> to vector<1x128xf32>
      %835 = math.log %834 : vector<1x128xf32>
      %cst_182 = arith.constant 2.000000e+00 : f32
      %836 = math.log %cst_182 : f32
      %837 = vector.broadcast %836 : f32 to vector<1x128xf32>
      %838 = arith.divf %835, %837 : vector<1x128xf32>
      %839 = arith.addf %829, %838 : vector<1x128xf32>
      %840 = arith.subf %70, %839 : vector<1x128xf32>
      %841 = vector.broadcast %cst_29 : f32 to vector<1x128xf32>
      %842 = arith.select %60, %840, %841 : vector<1x128xi1>, vector<1x128xf32>
      %c22_i32 = arith.constant 22 : i32
      %843 = vector.broadcast %842 : vector<1x128xf32> to vector<16x128xf32>
      %844 = arith.subf %843, %94 : vector<16x128xf32>
      %cst_183 = arith.constant dense<0xFF800000> : vector<16xf32>
      %845 = vector.multi_reduction <maximumf>, %844, %cst_183 [1] : vector<16x128xf32> to vector<16xf32>
      %846 = vector.shape_cast %845 : vector<16xf32> to vector<16x1xf32>
      %847 = vector.broadcast %846 : vector<16x1xf32> to vector<16x128xf32>
      %848 = arith.subf %844, %847 : vector<16x128xf32>
      %849 = math.exp2 %848 : vector<16x128xf32>
      %cst_184 = arith.constant dense<0.000000e+00> : vector<16xf32>
      %850 = vector.multi_reduction <add>, %849, %cst_184 [1] : vector<16x128xf32> to vector<16xf32>
      %851 = vector.shape_cast %850 : vector<16xf32> to vector<16x1xf32>
      %852 = math.log %851 : vector<16x1xf32>
      %cst_185 = arith.constant 2.000000e+00 : f32
      %853 = math.log %cst_185 : f32
      %854 = vector.broadcast %853 : f32 to vector<16x1xf32>
      %855 = arith.divf %852, %854 : vector<16x1xf32>
      %856 = arith.addf %846, %855 : vector<16x1xf32>
      %857 = arith.subf %65, %856 : vector<16x1xf32>
      %858 = vector.broadcast %cst_29 : f32 to vector<16x1xf32>
      %859 = arith.select %58, %857, %858 : vector<16x1xi1>, vector<16x1xf32>
      %860 = vector.broadcast %859 : vector<16x1xf32> to vector<16x128xf32>
      %861 = arith.subf %860, %94 : vector<16x128xf32>
      %cst_186 = arith.constant dense<0xFF800000> : vector<128xf32>
      %862 = vector.multi_reduction <maximumf>, %861, %cst_186 [0] : vector<16x128xf32> to vector<128xf32>
      %863 = vector.shape_cast %862 : vector<128xf32> to vector<1x128xf32>
      %864 = vector.broadcast %863 : vector<1x128xf32> to vector<16x128xf32>
      %865 = arith.subf %861, %864 : vector<16x128xf32>
      %866 = math.exp2 %865 : vector<16x128xf32>
      %cst_187 = arith.constant dense<0.000000e+00> : vector<128xf32>
      %867 = vector.multi_reduction <add>, %866, %cst_187 [0] : vector<16x128xf32> to vector<128xf32>
      %868 = vector.shape_cast %867 : vector<128xf32> to vector<1x128xf32>
      %869 = math.log %868 : vector<1x128xf32>
      %cst_188 = arith.constant 2.000000e+00 : f32
      %870 = math.log %cst_188 : f32
      %871 = vector.broadcast %870 : f32 to vector<1x128xf32>
      %872 = arith.divf %869, %871 : vector<1x128xf32>
      %873 = arith.addf %863, %872 : vector<1x128xf32>
      %874 = arith.subf %70, %873 : vector<1x128xf32>
      %875 = vector.broadcast %cst_29 : f32 to vector<1x128xf32>
      %876 = arith.select %60, %874, %875 : vector<1x128xi1>, vector<1x128xf32>
      %c23_i32 = arith.constant 23 : i32
      %877 = vector.broadcast %876 : vector<1x128xf32> to vector<16x128xf32>
      %878 = arith.subf %877, %94 : vector<16x128xf32>
      %cst_189 = arith.constant dense<0xFF800000> : vector<16xf32>
      %879 = vector.multi_reduction <maximumf>, %878, %cst_189 [1] : vector<16x128xf32> to vector<16xf32>
      %880 = vector.shape_cast %879 : vector<16xf32> to vector<16x1xf32>
      %881 = vector.broadcast %880 : vector<16x1xf32> to vector<16x128xf32>
      %882 = arith.subf %878, %881 : vector<16x128xf32>
      %883 = math.exp2 %882 : vector<16x128xf32>
      %cst_190 = arith.constant dense<0.000000e+00> : vector<16xf32>
      %884 = vector.multi_reduction <add>, %883, %cst_190 [1] : vector<16x128xf32> to vector<16xf32>
      %885 = vector.shape_cast %884 : vector<16xf32> to vector<16x1xf32>
      %886 = math.log %885 : vector<16x1xf32>
      %cst_191 = arith.constant 2.000000e+00 : f32
      %887 = math.log %cst_191 : f32
      %888 = vector.broadcast %887 : f32 to vector<16x1xf32>
      %889 = arith.divf %886, %888 : vector<16x1xf32>
      %890 = arith.addf %880, %889 : vector<16x1xf32>
      %891 = arith.subf %65, %890 : vector<16x1xf32>
      %892 = vector.broadcast %cst_29 : f32 to vector<16x1xf32>
      %893 = arith.select %58, %891, %892 : vector<16x1xi1>, vector<16x1xf32>
      %894 = vector.broadcast %893 : vector<16x1xf32> to vector<16x128xf32>
      %895 = arith.subf %894, %94 : vector<16x128xf32>
      %cst_192 = arith.constant dense<0xFF800000> : vector<128xf32>
      %896 = vector.multi_reduction <maximumf>, %895, %cst_192 [0] : vector<16x128xf32> to vector<128xf32>
      %897 = vector.shape_cast %896 : vector<128xf32> to vector<1x128xf32>
      %898 = vector.broadcast %897 : vector<1x128xf32> to vector<16x128xf32>
      %899 = arith.subf %895, %898 : vector<16x128xf32>
      %900 = math.exp2 %899 : vector<16x128xf32>
      %cst_193 = arith.constant dense<0.000000e+00> : vector<128xf32>
      %901 = vector.multi_reduction <add>, %900, %cst_193 [0] : vector<16x128xf32> to vector<128xf32>
      %902 = vector.shape_cast %901 : vector<128xf32> to vector<1x128xf32>
      %903 = math.log %902 : vector<1x128xf32>
      %cst_194 = arith.constant 2.000000e+00 : f32
      %904 = math.log %cst_194 : f32
      %905 = vector.broadcast %904 : f32 to vector<1x128xf32>
      %906 = arith.divf %903, %905 : vector<1x128xf32>
      %907 = arith.addf %897, %906 : vector<1x128xf32>
      %908 = arith.subf %70, %907 : vector<1x128xf32>
      %909 = vector.broadcast %cst_29 : f32 to vector<1x128xf32>
      %910 = arith.select %60, %908, %909 : vector<1x128xi1>, vector<1x128xf32>
      %c24_i32 = arith.constant 24 : i32
      %911 = vector.broadcast %910 : vector<1x128xf32> to vector<16x128xf32>
      %912 = arith.subf %911, %94 : vector<16x128xf32>
      %cst_195 = arith.constant dense<0xFF800000> : vector<16xf32>
      %913 = vector.multi_reduction <maximumf>, %912, %cst_195 [1] : vector<16x128xf32> to vector<16xf32>
      %914 = vector.shape_cast %913 : vector<16xf32> to vector<16x1xf32>
      %915 = vector.broadcast %914 : vector<16x1xf32> to vector<16x128xf32>
      %916 = arith.subf %912, %915 : vector<16x128xf32>
      %917 = math.exp2 %916 : vector<16x128xf32>
      %cst_196 = arith.constant dense<0.000000e+00> : vector<16xf32>
      %918 = vector.multi_reduction <add>, %917, %cst_196 [1] : vector<16x128xf32> to vector<16xf32>
      %919 = vector.shape_cast %918 : vector<16xf32> to vector<16x1xf32>
      %920 = math.log %919 : vector<16x1xf32>
      %cst_197 = arith.constant 2.000000e+00 : f32
      %921 = math.log %cst_197 : f32
      %922 = vector.broadcast %921 : f32 to vector<16x1xf32>
      %923 = arith.divf %920, %922 : vector<16x1xf32>
      %924 = arith.addf %914, %923 : vector<16x1xf32>
      %925 = arith.subf %65, %924 : vector<16x1xf32>
      %926 = vector.broadcast %cst_29 : f32 to vector<16x1xf32>
      %927 = arith.select %58, %925, %926 : vector<16x1xi1>, vector<16x1xf32>
      %928 = vector.broadcast %927 : vector<16x1xf32> to vector<16x128xf32>
      %929 = arith.subf %928, %94 : vector<16x128xf32>
      %cst_198 = arith.constant dense<0xFF800000> : vector<128xf32>
      %930 = vector.multi_reduction <maximumf>, %929, %cst_198 [0] : vector<16x128xf32> to vector<128xf32>
      %931 = vector.shape_cast %930 : vector<128xf32> to vector<1x128xf32>
      %932 = vector.broadcast %931 : vector<1x128xf32> to vector<16x128xf32>
      %933 = arith.subf %929, %932 : vector<16x128xf32>
      %934 = math.exp2 %933 : vector<16x128xf32>
      %cst_199 = arith.constant dense<0.000000e+00> : vector<128xf32>
      %935 = vector.multi_reduction <add>, %934, %cst_199 [0] : vector<16x128xf32> to vector<128xf32>
      %936 = vector.shape_cast %935 : vector<128xf32> to vector<1x128xf32>
      %937 = math.log %936 : vector<1x128xf32>
      %cst_200 = arith.constant 2.000000e+00 : f32
      %938 = math.log %cst_200 : f32
      %939 = vector.broadcast %938 : f32 to vector<1x128xf32>
      %940 = arith.divf %937, %939 : vector<1x128xf32>
      %941 = arith.addf %931, %940 : vector<1x128xf32>
      %942 = arith.subf %70, %941 : vector<1x128xf32>
      %943 = vector.broadcast %cst_29 : f32 to vector<1x128xf32>
      %944 = arith.select %60, %942, %943 : vector<1x128xi1>, vector<1x128xf32>
      %c25_i32 = arith.constant 25 : i32
      %c0_201 = arith.constant 0 : index
      %c0_202 = arith.constant 0 : index
      %945 = vector.load %arg4[%c0_201, %c0_202] : memref<16x1xf32, #tpu.memory_space<vmem>>, vector<16x1xf32>
      tpu.vector_store %arg4[%c0_201, %c0_202], %927 {strides = array<i32>} : memref<16x1xf32, #tpu.memory_space<vmem>>, vector<16x1xf32>,
      %c0_203 = arith.constant 0 : index
      %c0_204 = arith.constant 0 : index
      %946 = vector.load %arg5[%c0_203, %c0_204] : memref<1x128xf32, #tpu.memory_space<vmem>>, vector<1x128xf32>
      tpu.vector_store %arg5[%c0_203, %c0_204], %944 {strides = array<i32>} : memref<1x128xf32, #tpu.memory_space<vmem>>, vector<1x128xf32>,
      %947 = arith.subf %927, %92 : vector<16x1xf32>
      %948 = math.absf %947 : vector<16x1xf32>
      %949 = vector.shape_cast %948 : vector<16x1xf32> to vector<1x16x1xf32>
      %cst_205 = arith.constant dense<0xFF800000> : vector<1xf32>
      %950 = vector.multi_reduction <maximumf>, %949, %cst_205 [1, 2] : vector<1x16x1xf32> to vector<1xf32>
      %951 = vector.shape_cast %950 : vector<1xf32> to vector<1x1x1xf32>
      %952 = vector.extract %951[0, 0, 0] : f32 from vector<1x1x1xf32>
      %c1_i32_206 = arith.constant 1 : i32
      %953 = arith.addi %arg6, %c1_i32_206 : i32
      %cst_207 = arith.constant 0.00144269504 : f32
      %954 = arith.cmpf ogt, %952, %cst_207 : f32
      %955 = arith.extui %954 : i1 to i32
      scf.yield %953, %955 : i32, i32
    }
    %c0_30 = arith.constant 0 : index
    %c0_31 = arith.constant 0 : index
    %76 = vector.load %arg3[%c0_30, %c0_31] : memref<16x128xf32, #tpu.memory_space<vmem>>, vector<16x128xf32>
    %c0_32 = arith.constant 0 : index
    %c0_33 = arith.constant 0 : index
    %77 = vector.load %arg4[%c0_32, %c0_33] : memref<16x1xf32, #tpu.memory_space<vmem>>, vector<16x1xf32>
    %c0_34 = arith.constant 0 : index
    %c0_35 = arith.constant 0 : index
    %78 = vector.load %arg5[%c0_34, %c0_35] : memref<1x128xf32, #tpu.memory_space<vmem>>, vector<1x128xf32>
    %79 = vector.broadcast %77 : vector<16x1xf32> to vector<16x128xf32>
    %80 = vector.broadcast %78 : vector<1x128xf32> to vector<16x128xf32>
    %81 = arith.addf %79, %80 : vector<16x128xf32>
    %82 = arith.subf %81, %76 : vector<16x128xf32>
    %83 = math.exp2 %82 : vector<16x128xf32>
    %84 = arith.mulf %83, %76 : vector<16x128xf32>
    %cst_36 = arith.constant dense<0.000000e+00> : vector<16xf32>
    %85 = vector.multi_reduction <add>, %84, %cst_36 [1] : vector<16x128xf32> to vector<16xf32>
    %86 = vector.shape_cast %85 : vector<16xf32> to vector<16x1xf32>
    %cst_37 = arith.constant dense<0.000000e+00> : vector<1xf32>
    %87 = vector.multi_reduction <add>, %86, %cst_37 [0] : vector<16x1xf32> to vector<1xf32>
    %88 = vector.shape_cast %87 : vector<1xf32> to vector<1x1xf32>
    %cst_38 = arith.constant 0.0138629433 : f32
    %89 = vector.broadcast %cst_38 : f32 to vector<1x1xf32>
    %90 = arith.mulf %89, %88 : vector<1x1xf32>
    %c0_39 = arith.constant 0 : index
    %c0_40 = arith.constant 0 : index
    %91 = vector.load %arg2[%c0_39, %c0_40] : memref<1x1xf32, #tpu.memory_space<vmem>>, vector<1x1xf32>
    tpu.vector_store %arg2[%c0_39, %c0_40], %90 {strides = array<i32>} : memref<1x1xf32, #tpu.memory_space<vmem>>, vector<1x1xf32>,
    return
  }
}

</mosaic_0001>

<llo_original>
// kernel: tpu_custom_call.1
$region0: #{tpu_custom_call.1}
  #allocation0 [shape = 'u32[]', space=smem, size = 0x4, offset = 0x4, fixed_abs, tag = 'smem constant byte address 0x4 - core index']
  #allocation1 [shape = 'u32[72,128]{1,0:T(1,128)}', space=vmem, size = 0x9000, scoped, tag = 'internal scratch']
  #allocation2 [shape = 'f32[16,128]{1,0:T(8,128)}', space=vmem, size = 0x2000, scoped, tag = 'scratch operand']
  #allocation3 [shape = 'f32[16,1]{1,0:T(8,128)}', space=vmem, size = 0x2000, scoped, tag = 'scratch operand']
  #allocation4 [shape = 'f32[1,128]{1,0:T(1,128)}', space=vmem, size = 0x200, scoped, tag = 'scratch operand']
  %s0 = inlined_call_operand.vmem [shape: f32[16,2], index: 0, kind: input, shape index: {}]
  %s1 = inlined_call_operand.vmem [shape: f32[2,128], index: 1, kind: input, shape index: {}]
  %s2 = inlined_call_operand.hbm [shape: f32[1,1], index: 2, kind: output, shape index: {}]
  %s3 = sld [smem:[#allocation0]]
  $region25: #{tpu_custom_call.1} parent=0
    _
  %s5 = ssub.s32 1, %s3
  %s6 = scalar_select 0, %s5, %s3
  $region1: #{tpu_custom_call.1} parent=0
    #allocation5 [shape = 'u8[512]{0}', space=vmem, size = 0x400, scoped, tag = 'output window, operand 0, single buffered']
    #allocation6 [shape = 's32[1]{0}', space=sflag, size = 0x4, scoped, tag = 'scoped memory for tpu_custom_call.1']
    %7 = vsyncpa [#allocation6], 0
    // Predicated region
    $region2: #{tpu_custom_call.1} parent=1 // pred_check
      _
    $region3: #{tpu_custom_call.1} parent=1 // pred_check_branch
      %9 = sbr.rel (0) target = $region5
    $region4: #{tpu_custom_call.1} parent=1 // pred_region
      _
    $region5: #{tpu_custom_call.1} parent=1 // pred_fallthru
      _
    // Predicated region
    $region6: #{tpu_custom_call.1} parent=1 // pred_check
      _
    $region7: #{tpu_custom_call.1} parent=1 // pred_check_branch
      %11 = sbr.rel (0) target = $region9
    $region8: #{tpu_custom_call.1} parent=1 // pred_region
      _
    $region9: #{tpu_custom_call.1} parent=1 // pred_fallthru
      _
    %v12 = vld [vmem:[%s0] sm:$0xff]
    %v13 = vld [vmem:[%s0 + $0x8] sm:$0xff]
    %v14 = vld [vmem:[%s1] sm:$0x3]
    %16 = vset.pattern.permute.xlu0 0
    %17 = vperm.xlu0 %16, %v12
    %v18 = vpop.permute.xlu0 %17
    %21 = vset.pattern.permute.xlu0 0
    %22 = vperm.xlu0 %21, %v13
    %v23 = vpop.permute.xlu0 %22
    %v25 = vperm.slane %v14, 0
    %v26 = vsub.f32 %v18, %v25
    %v27 = vsub.f32 %v23, %v25
    %v28 = vand.u32 2147483647, %v26
    %v29 = vand.u32 2147483647, %v27
    %30 = vset.pattern.permute.xlu0 1
    %31 = vperm.xlu0 %30, %v12
    %v32 = vpop.permute.xlu0 %31
    %34 = vset.pattern.permute.xlu0 1
    %35 = vperm.xlu0 %34, %v13
    %v36 = vpop.permute.xlu0 %35
    %v38 = vperm.slane %v14, 1
    %v39 = vsub.f32 %v32, %v38
    %v40 = vsub.f32 %v36, %v38
    %v41 = vand.u32 2147483647, %v39
    %v42 = vand.u32 2147483647, %v40
    %v43 = vmax.f32 %v28, %v41
    %v44 = vmax.f32 %v29, %v42
    %45 = vrot.lane.b32.xlu0 %v12, 127
    %v46 = vpop.permute.xlu0 %45
    %47 = vrot.lane.b32.xlu0 %v13, 127
    %v48 = vpop.permute.xlu0 %47
    %v51 = vsub.f32 %v12, %v46
    %v52 = vsub.f32 %v13, %v48
    %v53 = vand.u32 2147483647, %v51
    %v54 = vand.u32 2147483647, %v52
    %v55 = vmul.f32 %v53, 0.5
    %v56 = vmul.f32 %v54, 0.5
    %v58 = vrot.slane %v14, 1
    %v60 = vsub.f32 %v14, %v58
    %v61 = vand.u32 2147483647, %v60
    %v62 = vmul.f32 %v61, 0.5
    %v63 = vmul.f32 %v43, 72.13475
    %v64 = vmul.f32 %v44, 72.13475
    %v65 = vmul.f32 %v55, 72.13475
    %v66 = vmul.f32 %v56, 72.13475
    %v67 = vmul.f32 %v62, 72.13475
    %v68 = vlaneseq
    %v69 = vshrl.u32 %v68, 7
    %v70 = vadd.s32 %v69, 8
    %v71 = vlaneseq
    %v72 = vand.u32 %v71, 127
    %vm73 = vcmp.gt.s32.totalorder %v69, 8
    %vm74 = vcmp.gt.s32.totalorder %v70, 8
    %vm75 = vcmp.gt.s32.totalorder %v72, 12
    %vm76 = vmor %vm73, %vm75
    %vm77 = vmor %vm74, %vm75
    %vm78 = vcmp.eq.s32.totalorder %v69, 8
    %vm79 = vcmp.eq.s32.totalorder %v70, 8
    %vm80 = vcmp.eq.s32.totalorder %v72, 12
    %v81 = vperm.slane %v67, 0
    %v82 = vsel %vm80, 0.0, %v81
    %84 = vset.pattern.permute.xlu0 0
    %85 = vperm.xlu0 %84, %v65
    %v86 = vpop.permute.xlu0 %85
    %89 = vset.pattern.permute.xlu0 0
    %90 = vperm.xlu0 %89, %v66
    %v91 = vpop.permute.xlu0 %90
    %v93 = vsel %vm80, %v86, %v63
    %v94 = vsel %vm80, %v91, %v64
    %v95 = vsel %vm78, %v82, %v93
    %v96 = vsel %vm79, %v82, %v94
    %v97 = vsel %vm76, 1e+09, %v95
    %v98 = vsel %vm77, 1e+09, %v96
    %99 = vst [vmem:[#allocation2] sm:$0xff] %v97
    %100 = vst [vmem:[#allocation2 + $0x8] sm:$0xff] %v98
    %vm101 = vcmp.le.s32.totalorder %v69, 8
    %vm102 = vcmp.le.s32.totalorder %v70, 8
    %vm103 = vcmp.le.s32.totalorder %v72, 12
    %v104 = vsel %vm78, 3.5849626, 0.0
    %v105 = vsel %vm79, 3.5849626, 0.0
    %v106 = vsel %vm80, 3.0, 0.0
    %vm107 = vcmask 7168
    %108 = vst.msk [vmem:[#allocation3] sm:$0xff] %vm107, 0.0
    %109 = vst.msk [vmem:[#allocation3 + $0x8] sm:$0xff] %vm107, 0.0
    %110 = vst [vmem:[#allocation4] sm:$0x1] 0.0
    // While loop
    $region10: #{tpu_custom_call.1} parent=1 // loop_pre_header
      _
    $region11: #{tpu_custom_call.1} parent=1 // loop_header
      %s112 = sphi 0, %s1454
      %s113 = sphi 1, %s1456
      %p114 = scmp.lt.s32.totalorder %s112, 20
      %p115 = scmp.gt.s32.totalorder %s113, 0
      %p116 = pnand %p114, %p115
      %p117 = pneg %p116
    $region12: #{tpu_custom_call.1} parent=1 // loop_header_branch
      %119 = sbr.rel (%p116) target = $region16
    $region13: #{tpu_custom_call.1} parent=1 // loop_body
      %v120 = vld [vmem:[#allocation3] sm:$0xff]
      %v121 = vld [vmem:[#allocation3 + $0x8] sm:$0xff]
      %v122 = vld [vmem:[#allocation4] sm:$0x1]
      %v123 = vld [vmem:[#allocation2] sm:$0xff]
      %v124 = vld [vmem:[#allocation2 + $0x8] sm:$0xff]
      %v126 = vperm.slane %v122, 0
      %v128 = vsub.f32 %v126, %v123
      %v129 = vsub.f32 %v126, %v124
      %130 = vmax.xlane.f32.xlu0 %v128
      %v131 = vpop.xlane.xlu0 %130
      %132 = vmax.xlane.f32.xlu0 %v129
      %v133 = vpop.xlane.xlu0 %132
      %v134 = vsub.f32 %v128, %v131
      %v135 = vsub.f32 %v129, %v133
      %v136 = vpow.pop %v134
      %v137 = vpow.pop %v135
      %138 = vadd.xlane.f32.xlu0 %v136
      %v139 = vpop.xlane.xlu0 %138
      %140 = vadd.xlane.f32.xlu0 %v137
      %v141 = vpop.xlane.xlu0 %140
      %v142 = vlog2.pop %v139
      %v143 = vmul.f32 %v142, 0.6931472
      %v144 = vlog2.pop %v141
      %v145 = vmul.f32 %v144, 0.6931472
      %v146 = vrcp.pop 0.6931472
      %v147 = vmul.f32 0.6931472, %v146
      %v148 = vsub.f32 1.0, %v147
      %v149 = vmul.f32 %v146, %v148
      %v150 = vadd.f32 %v146, %v149
      %vm151 = vweird.f32 %v146
      %v152 = vsel %vm151, %v146, %v150
      %v153 = vmul.f32 %v143, %v152
      %v154 = vmul.f32 %v145, %v152
      %v155 = vadd.f32 %v131, %v153
      %v156 = vadd.f32 %v133, %v154
      %v157 = vsub.f32 %v104, %v155
      %v158 = vsub.f32 %v105, %v156
      %v159 = vsel %vm101, %v157, 0.0
      %v160 = vsel %vm102, %v158, 0.0
      %v161 = vsub.f32 %v159, %v123
      %v162 = vsub.f32 %v160, %v124
      %v163 = vmax.f32 %v161, %v162
      %v164 = vrot.slane %v163, 4
      %v165 = vmax.f32 %v163, %v164
      %v166 = vrot.slane %v165, 2
      %v167 = vmax.f32 %v165, %v166
      %v168 = vrot.slane %v167, 1
      %v169 = vmax.f32 %v167, %v168
      %v170 = vsub.f32 %v161, %v169
      %v171 = vsub.f32 %v162, %v169
      %v172 = vpow.pop %v170
      %v173 = vpow.pop %v171
      %v174 = vadd.f32 %v172, %v173
      %v175 = vrot.slane %v174, 4
      %v176 = vadd.f32 %v174, %v175
      %v177 = vrot.slane %v176, 2
      %v178 = vadd.f32 %v176, %v177
      %v179 = vrot.slane %v178, 1
      %v180 = vadd.f32 %v178, %v179
      %v181 = vlog2.pop %v180
      %v182 = vmul.f32 %v181, 0.6931472
      %v183 = vmul.f32 %v182, %v152
      %v184 = vadd.f32 %v169, %v183
      %v185 = vsub.f32 %v106, %v184
      %v186 = vsel %vm103, %v185, 0.0
      %v187 = vsub.f32 %v186, %v123
      %v188 = vsub.f32 %v186, %v124
      %189 = vmax.xlane.f32.xlu0 %v187
      %v190 = vpop.xlane.xlu0 %189
      %191 = vmax.xlane.f32.xlu0 %v188
      %v192 = vpop.xlane.xlu0 %191
      %v193 = vsub.f32 %v187, %v190
      %v194 = vsub.f32 %v188, %v192
      %v195 = vpow.pop %v193
      %v196 = vpow.pop %v194
      %197 = vadd.xlane.f32.xlu0 %v195
      %v198 = vpop.xlane.xlu0 %197
      %199 = vadd.xlane.f32.xlu0 %v196
      %v200 = vpop.xlane.xlu0 %199
      %v201 = vlog2.pop %v198
      %v202 = vmul.f32 %v201, 0.6931472
      %v203 = vlog2.pop %v200
      %v204 = vmul.f32 %v203, 0.6931472
      %v205 = vmul.f32 %v202, %v152
      %v206 = vmul.f32 %v204, %v152
      %v207 = vadd.f32 %v190, %v205
      %v208 = vadd.f32 %v192, %v206
      %v209 = vsub.f32 %v104, %v207
      %v210 = vsub.f32 %v105, %v208
      %v211 = vsel %vm101, %v209, 0.0
      %v212 = vsel %vm102, %v210, 0.0
      %v213 = vsub.f32 %v211, %v123
      %v214 = vsub.f32 %v212, %v124
      %v215 = vmax.f32 %v213, %v214
      %v216 = vrot.slane %v215, 4
      %v217 = vmax.f32 %v215, %v216
      %v218 = vrot.slane %v217, 2
      %v219 = vmax.f32 %v217, %v218
      %v220 = vrot.slane %v219, 1
      %v221 = vmax.f32 %v219, %v220
      %v222 = vsub.f32 %v213, %v221
      %v223 = vsub.f32 %v214, %v221
      %v224 = vpow.pop %v222
      %v225 = vpow.pop %v223
      %v226 = vadd.f32 %v224, %v225
      %v227 = vrot.slane %v226, 4
      %v228 = vadd.f32 %v226, %v227
      %v229 = vrot.slane %v228, 2
      %v230 = vadd.f32 %v228, %v229
      %v231 = vrot.slane %v230, 1
      %v232 = vadd.f32 %v230, %v231
      %v233 = vlog2.pop %v232
      %v234 = vmul.f32 %v233, 0.6931472
      %v235 = vmul.f32 %v234, %v152
      %v236 = vadd.f32 %v221, %v235
      %v237 = vsub.f32 %v106, %v236
      %v238 = vsel %vm103, %v237, 0.0
      %v239 = vsub.f32 %v238, %v123
      %v240 = vsub.f32 %v238, %v124
      %241 = vmax.xlane.f32.xlu0 %v239
      %v242 = vpop.xlane.xlu0 %241
      %243 = vmax.xlane.f32.xlu0 %v240
      %v244 = vpop.xlane.xlu0 %243
      %v245 = vsub.f32 %v239, %v242
      %v246 = vsub.f32 %v240, %v244
      %v247 = vpow.pop %v245
      %v248 = vpow.pop %v246
      %249 = vadd.xlane.f32.xlu0 %v247
      %v250 = vpop.xlane.xlu0 %249
      %251 = vadd.xlane.f32.xlu0 %v248
      %v252 = vpop.xlane.xlu0 %251
      %v253 = vlog2.pop %v250
      %v254 = vmul.f32 %v253, 0.6931472
      %v255 = vlog2.pop %v252
      %v256 = vmul.f32 %v255, 0.6931472
      %v257 = vmul.f32 %v254, %v152
      %v258 = vmul.f32 %v256, %v152
      %v259 = vadd.f32 %v242, %v257
      %v260 = vadd.f32 %v244, %v258
      %v261 = vsub.f32 %v104, %v259
      %v262 = vsub.f32 %v105, %v260
      %v263 = vsel %vm101, %v261, 0.0
      %v264 = vsel %vm102, %v262, 0.0
      %v265 = vsub.f32 %v263, %v123
      %v266 = vsub.f32 %v264, %v124
      %v267 = vmax.f32 %v265, %v266
      %v268 = vrot.slane %v267, 4
      %v269 = vmax.f32 %v267, %v268
      %v270 = vrot.slane %v269, 2
      %v271 = vmax.f32 %v269, %v270
      %v272 = vrot.slane %v271, 1
      %v273 = vmax.f32 %v271, %v272
      %v274 = vsub.f32 %v265, %v273
      %v275 = vsub.f32 %v266, %v273
      %v276 = vpow.pop %v274
      %v277 = vpow.pop %v275
      %v278 = vadd.f32 %v276, %v277
      %v279 = vrot.slane %v278, 4
      %v280 = vadd.f32 %v278, %v279
      %v281 = vrot.slane %v280, 2
      %v282 = vadd.f32 %v280, %v281
      %v283 = vrot.slane %v282, 1
      %v284 = vadd.f32 %v282, %v283
      %v285 = vlog2.pop %v284
      %v286 = vmul.f32 %v285, 0.6931472
      %v287 = vmul.f32 %v286, %v152
      %v288 = vadd.f32 %v273, %v287
      %v289 = vsub.f32 %v106, %v288
      %v290 = vsel %vm103, %v289, 0.0
      %v291 = vsub.f32 %v290, %v123
      %v292 = vsub.f32 %v290, %v124
      %293 = vmax.xlane.f32.xlu0 %v291
      %v294 = vpop.xlane.xlu0 %293
      %295 = vmax.xlane.f32.xlu0 %v292
      %v296 = vpop.xlane.xlu0 %295
      %v297 = vsub.f32 %v291, %v294
      %v298 = vsub.f32 %v292, %v296
      %v299 = vpow.pop %v297
      %v300 = vpow.pop %v298
      %301 = vadd.xlane.f32.xlu0 %v299
      %v302 = vpop.xlane.xlu0 %301
      %303 = vadd.xlane.f32.xlu0 %v300
      %v304 = vpop.xlane.xlu0 %303
      %v305 = vlog2.pop %v302
      %v306 = vmul.f32 %v305, 0.6931472
      %v307 = vlog2.pop %v304
      %v308 = vmul.f32 %v307, 0.6931472
      %v309 = vmul.f32 %v306, %v152
      %v310 = vmul.f32 %v308, %v152
      %v311 = vadd.f32 %v294, %v309
      %v312 = vadd.f32 %v296, %v310
      %v313 = vsub.f32 %v104, %v311
      %v314 = vsub.f32 %v105, %v312
      %v315 = vsel %vm101, %v313, 0.0
      %v316 = vsel %vm102, %v314, 0.0
      %v317 = vsub.f32 %v315, %v123
      %v318 = vsub.f32 %v316, %v124
      %v319 = vmax.f32 %v317, %v318
      %v320 = vrot.slane %v319, 4
      %v321 = vmax.f32 %v319, %v320
      %v322 = vrot.slane %v321, 2
      %v323 = vmax.f32 %v321, %v322
      %v324 = vrot.slane %v323, 1
      %v325 = vmax.f32 %v323, %v324
      %v326 = vsub.f32 %v317, %v325
      %v327 = vsub.f32 %v318, %v325
      %v328 = vpow.pop %v326
      %v329 = vpow.pop %v327
      %v330 = vadd.f32 %v328, %v329
      %v331 = vrot.slane %v330, 4
      %v332 = vadd.f32 %v330, %v331
      %v333 = vrot.slane %v332, 2
      %v334 = vadd.f32 %v332, %v333
      %v335 = vrot.slane %v334, 1
      %v336 = vadd.f32 %v334, %v335
      %v337 = vlog2.pop %v336
      %v338 = vmul.f32 %v337, 0.6931472
      %v339 = vmul.f32 %v338, %v152
      %v340 = vadd.f32 %v325, %v339
      %v341 = vsub.f32 %v106, %v340
      %v342 = vsel %vm103, %v341, 0.0
      %v343 = vsub.f32 %v342, %v123
      %v344 = vsub.f32 %v342, %v124
      %345 = vmax.xlane.f32.xlu0 %v343
      %v346 = vpop.xlane.xlu0 %345
      %347 = vmax.xlane.f32.xlu0 %v344
      %v348 = vpop.xlane.xlu0 %347
      %v349 = vsub.f32 %v343, %v346
      %v350 = vsub.f32 %v344, %v348
      %v351 = vpow.pop %v349
      %v352 = vpow.pop %v350
      %353 = vadd.xlane.f32.xlu0 %v351
      %v354 = vpop.xlane.xlu0 %353
      %355 = vadd.xlane.f32.xlu0 %v352
      %v356 = vpop.xlane.xlu0 %355
      %v357 = vlog2.pop %v354
      %v358 = vmul.f32 %v357, 0.6931472
      %v359 = vlog2.pop %v356
      %v360 = vmul.f32 %v359, 0.6931472
      %v361 = vmul.f32 %v358, %v152
      %v362 = vmul.f32 %v360, %v152
      %v363 = vadd.f32 %v346, %v361
      %v364 = vadd.f32 %v348, %v362
      %v365 = vsub.f32 %v104, %v363
      %v366 = vsub.f32 %v105, %v364
      %v367 = vsel %vm101, %v365, 0.0
      %v368 = vsel %vm102, %v366, 0.0
      %v369 = vsub.f32 %v367, %v123
      %v370 = vsub.f32 %v368, %v124
      %v371 = vmax.f32 %v369, %v370
      %v372 = vrot.slane %v371, 4
      %v373 = vmax.f32 %v371, %v372
      %v374 = vrot.slane %v373, 2
      %v375 = vmax.f32 %v373, %v374
      %v376 = vrot.slane %v375, 1
      %v377 = vmax.f32 %v375, %v376
      %v378 = vsub.f32 %v369, %v377
      %v379 = vsub.f32 %v370, %v377
      %v380 = vpow.pop %v378
      %v381 = vpow.pop %v379
      %v382 = vadd.f32 %v380, %v381
      %v383 = vrot.slane %v382, 4
      %v384 = vadd.f32 %v382, %v383
      %v385 = vrot.slane %v384, 2
      %v386 = vadd.f32 %v384, %v385
      %v387 = vrot.slane %v386, 1
      %v388 = vadd.f32 %v386, %v387
      %v389 = vlog2.pop %v388
      %v390 = vmul.f32 %v389, 0.6931472
      %v391 = vmul.f32 %v390, %v152
      %v392 = vadd.f32 %v377, %v391
      %v393 = vsub.f32 %v106, %v392
      %v394 = vsel %vm103, %v393, 0.0
      %v395 = vsub.f32 %v394, %v123
      %v396 = vsub.f32 %v394, %v124
      %397 = vmax.xlane.f32.xlu0 %v395
      %v398 = vpop.xlane.xlu0 %397
      %399 = vmax.xlane.f32.xlu0 %v396
      %v400 = vpop.xlane.xlu0 %399
      %v401 = vsub.f32 %v395, %v398
      %v402 = vsub.f32 %v396, %v400
      %v403 = vpow.pop %v401
      %v404 = vpow.pop %v402
      %405 = vadd.xlane.f32.xlu0 %v403
      %v406 = vpop.xlane.xlu0 %405
      %407 = vadd.xlane.f32.xlu0 %v404
      %v408 = vpop.xlane.xlu0 %407
      %v409 = vlog2.pop %v406
      %v410 = vmul.f32 %v409, 0.6931472
      %v411 = vlog2.pop %v408
      %v412 = vmul.f32 %v411, 0.6931472
      %v413 = vmul.f32 %v410, %v152
      %v414 = vmul.f32 %v412, %v152
      %v415 = vadd.f32 %v398, %v413
      %v416 = vadd.f32 %v400, %v414
      %v417 = vsub.f32 %v104, %v415
      %v418 = vsub.f32 %v105, %v416
      %v419 = vsel %vm101, %v417, 0.0
      %v420 = vsel %vm102, %v418, 0.0
      %v421 = vsub.f32 %v419, %v123
      %v422 = vsub.f32 %v420, %v124
      %v423 = vmax.f32 %v421, %v422
      %v424 = vrot.slane %v423, 4
      %v425 = vmax.f32 %v423, %v424
      %v426 = vrot.slane %v425, 2
      %v427 = vmax.f32 %v425, %v426
      %v428 = vrot.slane %v427, 1
      %v429 = vmax.f32 %v427, %v428
      %v430 = vsub.f32 %v421, %v429
      %v431 = vsub.f32 %v422, %v429
      %v432 = vpow.pop %v430
      %v433 = vpow.pop %v431
      %v434 = vadd.f32 %v432, %v433
      %v435 = vrot.slane %v434, 4
      %v436 = vadd.f32 %v434, %v435
      %v437 = vrot.slane %v436, 2
      %v438 = vadd.f32 %v436, %v437
      %v439 = vrot.slane %v438, 1
      %v440 = vadd.f32 %v438, %v439
      %v441 = vlog2.pop %v440
      %v442 = vmul.f32 %v441, 0.6931472
      %v443 = vmul.f32 %v442, %v152
      %v444 = vadd.f32 %v429, %v443
      %v445 = vsub.f32 %v106, %v444
      %v446 = vsel %vm103, %v445, 0.0
      %v447 = vsub.f32 %v446, %v123
      %v448 = vsub.f32 %v446, %v124
      %449 = vmax.xlane.f32.xlu0 %v447
      %v450 = vpop.xlane.xlu0 %449
      %451 = vmax.xlane.f32.xlu0 %v448
      %v452 = vpop.xlane.xlu0 %451
      %v453 = vsub.f32 %v447, %v450
      %v454 = vsub.f32 %v448, %v452
      %v455 = vpow.pop %v453
      %v456 = vpow.pop %v454
      %457 = vadd.xlane.f32.xlu0 %v455
      %v458 = vpop.xlane.xlu0 %457
      %459 = vadd.xlane.f32.xlu0 %v456
      %v460 = vpop.xlane.xlu0 %459
      %v461 = vlog2.pop %v458
      %v462 = vmul.f32 %v461, 0.6931472
      %v463 = vlog2.pop %v460
      %v464 = vmul.f32 %v463, 0.6931472
      %v465 = vmul.f32 %v462, %v152
      %v466 = vmul.f32 %v464, %v152
      %v467 = vadd.f32 %v450, %v465
      %v468 = vadd.f32 %v452, %v466
      %v469 = vsub.f32 %v104, %v467
      %v470 = vsub.f32 %v105, %v468
      %v471 = vsel %vm101, %v469, 0.0
      %v472 = vsel %vm102, %v470, 0.0
      %v473 = vsub.f32 %v471, %v123
      %v474 = vsub.f32 %v472, %v124
      %v475 = vmax.f32 %v473, %v474
      %v476 = vrot.slane %v475, 4
      %v477 = vmax.f32 %v475, %v476
      %v478 = vrot.slane %v477, 2
      %v479 = vmax.f32 %v477, %v478
      %v480 = vrot.slane %v479, 1
      %v481 = vmax.f32 %v479, %v480
      %v482 = vsub.f32 %v473, %v481
      %v483 = vsub.f32 %v474, %v481
      %v484 = vpow.pop %v482
      %v485 = vpow.pop %v483
      %v486 = vadd.f32 %v484, %v485
      %v487 = vrot.slane %v486, 4
      %v488 = vadd.f32 %v486, %v487
      %v489 = vrot.slane %v488, 2
      %v490 = vadd.f32 %v488, %v489
      %v491 = vrot.slane %v490, 1
      %v492 = vadd.f32 %v490, %v491
      %v493 = vlog2.pop %v492
      %v494 = vmul.f32 %v493, 0.6931472
      %v495 = vmul.f32 %v494, %v152
      %v496 = vadd.f32 %v481, %v495
      %v497 = vsub.f32 %v106, %v496
      %v498 = vsel %vm103, %v497, 0.0
      %v499 = vsub.f32 %v498, %v123
      %v500 = vsub.f32 %v498, %v124
      %501 = vmax.xlane.f32.xlu0 %v499
      %v502 = vpop.xlane.xlu0 %501
      %503 = vmax.xlane.f32.xlu0 %v500
      %v504 = vpop.xlane.xlu0 %503
      %v505 = vsub.f32 %v499, %v502
      %v506 = vsub.f32 %v500, %v504
      %v507 = vpow.pop %v505
      %v508 = vpow.pop %v506
      %509 = vadd.xlane.f32.xlu0 %v507
      %v510 = vpop.xlane.xlu0 %509
      %511 = vadd.xlane.f32.xlu0 %v508
      %v512 = vpop.xlane.xlu0 %511
      %v513 = vlog2.pop %v510
      %v514 = vmul.f32 %v513, 0.6931472
      %v515 = vlog2.pop %v512
      %v516 = vmul.f32 %v515, 0.6931472
      %v517 = vmul.f32 %v514, %v152
      %v518 = vmul.f32 %v516, %v152
      %v519 = vadd.f32 %v502, %v517
      %v520 = vadd.f32 %v504, %v518
      %v521 = vsub.f32 %v104, %v519
      %v522 = vsub.f32 %v105, %v520
      %v523 = vsel %vm101, %v521, 0.0
      %v524 = vsel %vm102, %v522, 0.0
      %v525 = vsub.f32 %v523, %v123
      %v526 = vsub.f32 %v524, %v124
      %v527 = vmax.f32 %v525, %v526
      %v528 = vrot.slane %v527, 4
      %v529 = vmax.f32 %v527, %v528
      %v530 = vrot.slane %v529, 2
      %v531 = vmax.f32 %v529, %v530
      %v532 = vrot.slane %v531, 1
      %v533 = vmax.f32 %v531, %v532
      %v534 = vsub.f32 %v525, %v533
      %v535 = vsub.f32 %v526, %v533
      %v536 = vpow.pop %v534
      %v537 = vpow.pop %v535
      %v538 = vadd.f32 %v536, %v537
      %v539 = vrot.slane %v538, 4
      %v540 = vadd.f32 %v538, %v539
      %v541 = vrot.slane %v540, 2
      %v542 = vadd.f32 %v540, %v541
      %v543 = vrot.slane %v542, 1
      %v544 = vadd.f32 %v542, %v543
      %v545 = vlog2.pop %v544
      %v546 = vmul.f32 %v545, 0.6931472
      %v547 = vmul.f32 %v546, %v152
      %v548 = vadd.f32 %v533, %v547
      %v549 = vsub.f32 %v106, %v548
      %v550 = vsel %vm103, %v549, 0.0
      %v551 = vsub.f32 %v550, %v123
      %v552 = vsub.f32 %v550, %v124
      %553 = vmax.xlane.f32.xlu0 %v551
      %v554 = vpop.xlane.xlu0 %553
      %555 = vmax.xlane.f32.xlu0 %v552
      %v556 = vpop.xlane.xlu0 %555
      %v557 = vsub.f32 %v551, %v554
      %v558 = vsub.f32 %v552, %v556
      %v559 = vpow.pop %v557
      %v560 = vpow.pop %v558
      %561 = vadd.xlane.f32.xlu0 %v559
      %v562 = vpop.xlane.xlu0 %561
      %563 = vadd.xlane.f32.xlu0 %v560
      %v564 = vpop.xlane.xlu0 %563
      %v565 = vlog2.pop %v562
      %v566 = vmul.f32 %v565, 0.6931472
      %v567 = vlog2.pop %v564
      %v568 = vmul.f32 %v567, 0.6931472
      %v569 = vmul.f32 %v566, %v152
      %v570 = vmul.f32 %v568, %v152
      %v571 = vadd.f32 %v554, %v569
      %v572 = vadd.f32 %v556, %v570
      %v573 = vsub.f32 %v104, %v571
      %v574 = vsub.f32 %v105, %v572
      %v575 = vsel %vm101, %v573, 0.0
      %v576 = vsel %vm102, %v574, 0.0
      %v577 = vsub.f32 %v575, %v123
      %v578 = vsub.f32 %v576, %v124
      %v579 = vmax.f32 %v577, %v578
      %v580 = vrot.slane %v579, 4
      %v581 = vmax.f32 %v579, %v580
      %v582 = vrot.slane %v581, 2
      %v583 = vmax.f32 %v581, %v582
      %v584 = vrot.slane %v583, 1
      %v585 = vmax.f32 %v583, %v584
      %v586 = vsub.f32 %v577, %v585
      %v587 = vsub.f32 %v578, %v585
      %v588 = vpow.pop %v586
      %v589 = vpow.pop %v587
      %v590 = vadd.f32 %v588, %v589
      %v591 = vrot.slane %v590, 4
      %v592 = vadd.f32 %v590, %v591
      %v593 = vrot.slane %v592, 2
      %v594 = vadd.f32 %v592, %v593
      %v595 = vrot.slane %v594, 1
      %v596 = vadd.f32 %v594, %v595
      %v597 = vlog2.pop %v596
      %v598 = vmul.f32 %v597, 0.6931472
      %v599 = vmul.f32 %v598, %v152
      %v600 = vadd.f32 %v585, %v599
      %v601 = vsub.f32 %v106, %v600
      %v602 = vsel %vm103, %v601, 0.0
      %v603 = vsub.f32 %v602, %v123
      %v604 = vsub.f32 %v602, %v124
      %605 = vmax.xlane.f32.xlu0 %v603
      %v606 = vpop.xlane.xlu0 %605
      %607 = vmax.xlane.f32.xlu0 %v604
      %v608 = vpop.xlane.xlu0 %607
      %v609 = vsub.f32 %v603, %v606
      %v610 = vsub.f32 %v604, %v608
      %v611 = vpow.pop %v609
      %v612 = vpow.pop %v610
      %613 = vadd.xlane.f32.xlu0 %v611
      %v614 = vpop.xlane.xlu0 %613
      %615 = vadd.xlane.f32.xlu0 %v612
      %v616 = vpop.xlane.xlu0 %615
      %v617 = vlog2.pop %v614
      %v618 = vmul.f32 %v617, 0.6931472
      %v619 = vlog2.pop %v616
      %v620 = vmul.f32 %v619, 0.6931472
      %v621 = vmul.f32 %v618, %v152
      %v622 = vmul.f32 %v620, %v152
      %v623 = vadd.f32 %v606, %v621
      %v624 = vadd.f32 %v608, %v622
      %v625 = vsub.f32 %v104, %v623
      %v626 = vsub.f32 %v105, %v624
      %v627 = vsel %vm101, %v625, 0.0
      %v628 = vsel %vm102, %v626, 0.0
      %v629 = vsub.f32 %v627, %v123
      %v630 = vsub.f32 %v628, %v124
      %v631 = vmax.f32 %v629, %v630
      %v632 = vrot.slane %v631, 4
      %v633 = vmax.f32 %v631, %v632
      %v634 = vrot.slane %v633, 2
      %v635 = vmax.f32 %v633, %v634
      %v636 = vrot.slane %v635, 1
      %v637 = vmax.f32 %v635, %v636
      %v638 = vsub.f32 %v629, %v637
      %v639 = vsub.f32 %v630, %v637
      %v640 = vpow.pop %v638
      %v641 = vpow.pop %v639
      %v642 = vadd.f32 %v640, %v641
      %v643 = vrot.slane %v642, 4
      %v644 = vadd.f32 %v642, %v643
      %v645 = vrot.slane %v644, 2
      %v646 = vadd.f32 %v644, %v645
      %v647 = vrot.slane %v646, 1
      %v648 = vadd.f32 %v646, %v647
      %v649 = vlog2.pop %v648
      %v650 = vmul.f32 %v649, 0.6931472
      %v651 = vmul.f32 %v650, %v152
      %v652 = vadd.f32 %v637, %v651
      %v653 = vsub.f32 %v106, %v652
      %v654 = vsel %vm103, %v653, 0.0
      %v655 = vsub.f32 %v654, %v123
      %v656 = vsub.f32 %v654, %v124
      %657 = vmax.xlane.f32.xlu0 %v655
      %v658 = vpop.xlane.xlu0 %657
      %659 = vmax.xlane.f32.xlu0 %v656
      %v660 = vpop.xlane.xlu0 %659
      %v661 = vsub.f32 %v655, %v658
      %v662 = vsub.f32 %v656, %v660
      %v663 = vpow.pop %v661
      %v664 = vpow.pop %v662
      %665 = vadd.xlane.f32.xlu0 %v663
      %v666 = vpop.xlane.xlu0 %665
      %667 = vadd.xlane.f32.xlu0 %v664
      %v668 = vpop.xlane.xlu0 %667
      %v669 = vlog2.pop %v666
      %v670 = vmul.f32 %v669, 0.6931472
      %v671 = vlog2.pop %v668
      %v672 = vmul.f32 %v671, 0.6931472
      %v673 = vmul.f32 %v670, %v152
      %v674 = vmul.f32 %v672, %v152
      %v675 = vadd.f32 %v658, %v673
      %v676 = vadd.f32 %v660, %v674
      %v677 = vsub.f32 %v104, %v675
      %v678 = vsub.f32 %v105, %v676
      %v679 = vsel %vm101, %v677, 0.0
      %v680 = vsel %vm102, %v678, 0.0
      %v681 = vsub.f32 %v679, %v123
      %v682 = vsub.f32 %v680, %v124
      %v683 = vmax.f32 %v681, %v682
      %v684 = vrot.slane %v683, 4
      %v685 = vmax.f32 %v683, %v684
      %v686 = vrot.slane %v685, 2
      %v687 = vmax.f32 %v685, %v686
      %v688 = vrot.slane %v687, 1
      %v689 = vmax.f32 %v687, %v688
      %v690 = vsub.f32 %v681, %v689
      %v691 = vsub.f32 %v682, %v689
      %v692 = vpow.pop %v690
      %v693 = vpow.pop %v691
      %v694 = vadd.f32 %v692, %v693
      %v695 = vrot.slane %v694, 4
      %v696 = vadd.f32 %v694, %v695
      %v697 = vrot.slane %v696, 2
      %v698 = vadd.f32 %v696, %v697
      %v699 = vrot.slane %v698, 1
      %v700 = vadd.f32 %v698, %v699
      %v701 = vlog2.pop %v700
      %v702 = vmul.f32 %v701, 0.6931472
      %v703 = vmul.f32 %v702, %v152
      %v704 = vadd.f32 %v689, %v703
      %v705 = vsub.f32 %v106, %v704
      %v706 = vsel %vm103, %v705, 0.0
      %v707 = vsub.f32 %v706, %v123
      %v708 = vsub.f32 %v706, %v124
      %709 = vmax.xlane.f32.xlu0 %v707
      %v710 = vpop.xlane.xlu0 %709
      %711 = vmax.xlane.f32.xlu0 %v708
      %v712 = vpop.xlane.xlu0 %711
      %v713 = vsub.f32 %v707, %v710
      %v714 = vsub.f32 %v708, %v712
      %v715 = vpow.pop %v713
      %v716 = vpow.pop %v714
      %717 = vadd.xlane.f32.xlu0 %v715
      %v718 = vpop.xlane.xlu0 %717
      %719 = vadd.xlane.f32.xlu0 %v716
      %v720 = vpop.xlane.xlu0 %719
      %v721 = vlog2.pop %v718
      %v722 = vmul.f32 %v721, 0.6931472
      %v723 = vlog2.pop %v720
      %v724 = vmul.f32 %v723, 0.6931472
      %v725 = vmul.f32 %v722, %v152
      %v726 = vmul.f32 %v724, %v152
      %v727 = vadd.f32 %v710, %v725
      %v728 = vadd.f32 %v712, %v726
      %v729 = vsub.f32 %v104, %v727
      %v730 = vsub.f32 %v105, %v728
      %v731 = vsel %vm101, %v729, 0.0
      %v732 = vsel %vm102, %v730, 0.0
      %v733 = vsub.f32 %v731, %v123
      %v734 = vsub.f32 %v732, %v124
      %v735 = vmax.f32 %v733, %v734
      %v736 = vrot.slane %v735, 4
      %v737 = vmax.f32 %v735, %v736
      %v738 = vrot.slane %v737, 2
      %v739 = vmax.f32 %v737, %v738
      %v740 = vrot.slane %v739, 1
      %v741 = vmax.f32 %v739, %v740
      %v742 = vsub.f32 %v733, %v741
      %v743 = vsub.f32 %v734, %v741
      %v744 = vpow.pop %v742
      %v745 = vpow.pop %v743
      %v746 = vadd.f32 %v744, %v745
      %v747 = vrot.slane %v746, 4
      %v748 = vadd.f32 %v746, %v747
      %v749 = vrot.slane %v748, 2
      %v750 = vadd.f32 %v748, %v749
      %v751 = vrot.slane %v750, 1
      %v752 = vadd.f32 %v750, %v751
      %v753 = vlog2.pop %v752
      %v754 = vmul.f32 %v753, 0.6931472
      %v755 = vmul.f32 %v754, %v152
      %v756 = vadd.f32 %v741, %v755
      %v757 = vsub.f32 %v106, %v756
      %v758 = vsel %vm103, %v757, 0.0
      %v759 = vsub.f32 %v758, %v123
      %v760 = vsub.f32 %v758, %v124
      %761 = vmax.xlane.f32.xlu0 %v759
      %v762 = vpop.xlane.xlu0 %761
      %763 = vmax.xlane.f32.xlu0 %v760
      %v764 = vpop.xlane.xlu0 %763
      %v765 = vsub.f32 %v759, %v762
      %v766 = vsub.f32 %v760, %v764
      %v767 = vpow.pop %v765
      %v768 = vpow.pop %v766
      %769 = vadd.xlane.f32.xlu0 %v767
      %v770 = vpop.xlane.xlu0 %769
      %771 = vadd.xlane.f32.xlu0 %v768
      %v772 = vpop.xlane.xlu0 %771
      %v773 = vlog2.pop %v770
      %v774 = vmul.f32 %v773, 0.6931472
      %v775 = vlog2.pop %v772
      %v776 = vmul.f32 %v775, 0.6931472
      %v777 = vmul.f32 %v774, %v152
      %v778 = vmul.f32 %v776, %v152
      %v779 = vadd.f32 %v762, %v777
      %v780 = vadd.f32 %v764, %v778
      %v781 = vsub.f32 %v104, %v779
      %v782 = vsub.f32 %v105, %v780
      %v783 = vsel %vm101, %v781, 0.0
      %v784 = vsel %vm102, %v782, 0.0
      %v785 = vsub.f32 %v783, %v123
      %v786 = vsub.f32 %v784, %v124
      %v787 = vmax.f32 %v785, %v786
      %v788 = vrot.slane %v787, 4
      %v789 = vmax.f32 %v787, %v788
      %v790 = vrot.slane %v789, 2
      %v791 = vmax.f32 %v789, %v790
      %v792 = vrot.slane %v791, 1
      %v793 = vmax.f32 %v791, %v792
      %v794 = vsub.f32 %v785, %v793
      %v795 = vsub.f32 %v786, %v793
      %v796 = vpow.pop %v794
      %v797 = vpow.pop %v795
      %v798 = vadd.f32 %v796, %v797
      %v799 = vrot.slane %v798, 4
      %v800 = vadd.f32 %v798, %v799
      %v801 = vrot.slane %v800, 2
      %v802 = vadd.f32 %v800, %v801
      %v803 = vrot.slane %v802, 1
      %v804 = vadd.f32 %v802, %v803
      %v805 = vlog2.pop %v804
      %v806 = vmul.f32 %v805, 0.6931472
      %v807 = vmul.f32 %v806, %v152
      %v808 = vadd.f32 %v793, %v807
      %v809 = vsub.f32 %v106, %v808
      %v810 = vsel %vm103, %v809, 0.0
      %v811 = vsub.f32 %v810, %v123
      %v812 = vsub.f32 %v810, %v124
      %813 = vmax.xlane.f32.xlu0 %v811
      %v814 = vpop.xlane.xlu0 %813
      %815 = vmax.xlane.f32.xlu0 %v812
      %v816 = vpop.xlane.xlu0 %815
      %v817 = vsub.f32 %v811, %v814
      %v818 = vsub.f32 %v812, %v816
      %v819 = vpow.pop %v817
      %v820 = vpow.pop %v818
      %821 = vadd.xlane.f32.xlu0 %v819
      %v822 = vpop.xlane.xlu0 %821
      %823 = vadd.xlane.f32.xlu0 %v820
      %v824 = vpop.xlane.xlu0 %823
      %v825 = vlog2.pop %v822
      %v826 = vmul.f32 %v825, 0.6931472
      %v827 = vlog2.pop %v824
      %v828 = vmul.f32 %v827, 0.6931472
      %v829 = vmul.f32 %v826, %v152
      %v830 = vmul.f32 %v828, %v152
      %v831 = vadd.f32 %v814, %v829
      %v832 = vadd.f32 %v816, %v830
      %v833 = vsub.f32 %v104, %v831
      %v834 = vsub.f32 %v105, %v832
      %v835 = vsel %vm101, %v833, 0.0
      %v836 = vsel %vm102, %v834, 0.0
      %v837 = vsub.f32 %v835, %v123
      %v838 = vsub.f32 %v836, %v124
      %v839 = vmax.f32 %v837, %v838
      %v840 = vrot.slane %v839, 4
      %v841 = vmax.f32 %v839, %v840
      %v842 = vrot.slane %v841, 2
      %v843 = vmax.f32 %v841, %v842
      %v844 = vrot.slane %v843, 1
      %v845 = vmax.f32 %v843, %v844
      %v846 = vsub.f32 %v837, %v845
      %v847 = vsub.f32 %v838, %v845
      %v848 = vpow.pop %v846
      %v849 = vpow.pop %v847
      %v850 = vadd.f32 %v848, %v849
      %v851 = vrot.slane %v850, 4
      %v852 = vadd.f32 %v850, %v851
      %v853 = vrot.slane %v852, 2
      %v854 = vadd.f32 %v852, %v853
      %v855 = vrot.slane %v854, 1
      %v856 = vadd.f32 %v854, %v855
      %v857 = vlog2.pop %v856
      %v858 = vmul.f32 %v857, 0.6931472
      %v859 = vmul.f32 %v858, %v152
      %v860 = vadd.f32 %v845, %v859
      %v861 = vsub.f32 %v106, %v860
      %v862 = vsel %vm103, %v861, 0.0
      %v863 = vsub.f32 %v862, %v123
      %v864 = vsub.f32 %v862, %v124
      %865 = vmax.xlane.f32.xlu0 %v863
      %v866 = vpop.xlane.xlu0 %865
      %867 = vmax.xlane.f32.xlu0 %v864
      %v868 = vpop.xlane.xlu0 %867
      %v869 = vsub.f32 %v863, %v866
      %v870 = vsub.f32 %v864, %v868
      %v871 = vpow.pop %v869
      %v872 = vpow.pop %v870
      %873 = vadd.xlane.f32.xlu0 %v871
      %v874 = vpop.xlane.xlu0 %873
      %875 = vadd.xlane.f32.xlu0 %v872
      %v876 = vpop.xlane.xlu0 %875
      %v877 = vlog2.pop %v874
      %v878 = vmul.f32 %v877, 0.6931472
      %v879 = vlog2.pop %v876
      %v880 = vmul.f32 %v879, 0.6931472
      %v881 = vmul.f32 %v878, %v152
      %v882 = vmul.f32 %v880, %v152
      %v883 = vadd.f32 %v866, %v881
      %v884 = vadd.f32 %v868, %v882
      %v885 = vsub.f32 %v104, %v883
      %v886 = vsub.f32 %v105, %v884
      %v887 = vsel %vm101, %v885, 0.0
      %v888 = vsel %vm102, %v886, 0.0
      %v889 = vsub.f32 %v887, %v123
      %v890 = vsub.f32 %v888, %v124
      %v891 = vmax.f32 %v889, %v890
      %v892 = vrot.slane %v891, 4
      %v893 = vmax.f32 %v891, %v892
      %v894 = vrot.slane %v893, 2
      %v895 = vmax.f32 %v893, %v894
      %v896 = vrot.slane %v895, 1
      %v897 = vmax.f32 %v895, %v896
      %v898 = vsub.f32 %v889, %v897
      %v899 = vsub.f32 %v890, %v897
      %v900 = vpow.pop %v898
      %v901 = vpow.pop %v899
      %v902 = vadd.f32 %v900, %v901
      %v903 = vrot.slane %v902, 4
      %v904 = vadd.f32 %v902, %v903
      %v905 = vrot.slane %v904, 2
      %v906 = vadd.f32 %v904, %v905
      %v907 = vrot.slane %v906, 1
      %v908 = vadd.f32 %v906, %v907
      %v909 = vlog2.pop %v908
      %v910 = vmul.f32 %v909, 0.6931472
      %v911 = vmul.f32 %v910, %v152
      %v912 = vadd.f32 %v897, %v911
      %v913 = vsub.f32 %v106, %v912
      %v914 = vsel %vm103, %v913, 0.0
      %v915 = vsub.f32 %v914, %v123
      %v916 = vsub.f32 %v914, %v124
      %917 = vmax.xlane.f32.xlu0 %v915
      %v918 = vpop.xlane.xlu0 %917
      %919 = vmax.xlane.f32.xlu0 %v916
      %v920 = vpop.xlane.xlu0 %919
      %v921 = vsub.f32 %v915, %v918
      %v922 = vsub.f32 %v916, %v920
      %v923 = vpow.pop %v921
      %v924 = vpow.pop %v922
      %925 = vadd.xlane.f32.xlu0 %v923
      %v926 = vpop.xlane.xlu0 %925
      %927 = vadd.xlane.f32.xlu0 %v924
      %v928 = vpop.xlane.xlu0 %927
      %v929 = vlog2.pop %v926
      %v930 = vmul.f32 %v929, 0.6931472
      %v931 = vlog2.pop %v928
      %v932 = vmul.f32 %v931, 0.6931472
      %v933 = vmul.f32 %v930, %v152
      %v934 = vmul.f32 %v932, %v152
      %v935 = vadd.f32 %v918, %v933
      %v936 = vadd.f32 %v920, %v934
      %v937 = vsub.f32 %v104, %v935
      %v938 = vsub.f32 %v105, %v936
      %v939 = vsel %vm101, %v937, 0.0
      %v940 = vsel %vm102, %v938, 0.0
      %v941 = vsub.f32 %v939, %v123
      %v942 = vsub.f32 %v940, %v124
      %v943 = vmax.f32 %v941, %v942
      %v944 = vrot.slane %v943, 4
      %v945 = vmax.f32 %v943, %v944
      %v946 = vrot.slane %v945, 2
      %v947 = vmax.f32 %v945, %v946
      %v948 = vrot.slane %v947, 1
      %v949 = vmax.f32 %v947, %v948
      %v950 = vsub.f32 %v941, %v949
      %v951 = vsub.f32 %v942, %v949
      %v952 = vpow.pop %v950
      %v953 = vpow.pop %v951
      %v954 = vadd.f32 %v952, %v953
      %v955 = vrot.slane %v954, 4
      %v956 = vadd.f32 %v954, %v955
      %v957 = vrot.slane %v956, 2
      %v958 = vadd.f32 %v956, %v957
      %v959 = vrot.slane %v958, 1
      %v960 = vadd.f32 %v958, %v959
      %v961 = vlog2.pop %v960
      %v962 = vmul.f32 %v961, 0.6931472
      %v963 = vmul.f32 %v962, %v152
      %v964 = vadd.f32 %v949, %v963
      %v965 = vsub.f32 %v106, %v964
      %v966 = vsel %vm103, %v965, 0.0
      %v967 = vsub.f32 %v966, %v123
      %v968 = vsub.f32 %v966, %v124
      %969 = vmax.xlane.f32.xlu0 %v967
      %v970 = vpop.xlane.xlu0 %969
      %971 = vmax.xlane.f32.xlu0 %v968
      %v972 = vpop.xlane.xlu0 %971
      %v973 = vsub.f32 %v967, %v970
      %v974 = vsub.f32 %v968, %v972
      %v975 = vpow.pop %v973
      %v976 = vpow.pop %v974
      %977 = vadd.xlane.f32.xlu0 %v975
      %v978 = vpop.xlane.xlu0 %977
      %979 = vadd.xlane.f32.xlu0 %v976
      %v980 = vpop.xlane.xlu0 %979
      %v981 = vlog2.pop %v978
      %v982 = vmul.f32 %v981, 0.6931472
      %v983 = vlog2.pop %v980
      %v984 = vmul.f32 %v983, 0.6931472
      %v985 = vmul.f32 %v982, %v152
      %v986 = vmul.f32 %v984, %v152
      %v987 = vadd.f32 %v970, %v985
      %v988 = vadd.f32 %v972, %v986
      %v989 = vsub.f32 %v104, %v987
      %v990 = vsub.f32 %v105, %v988
      %v991 = vsel %vm101, %v989, 0.0
      %v992 = vsel %vm102, %v990, 0.0
      %v993 = vsub.f32 %v991, %v123
      %v994 = vsub.f32 %v992, %v124
      %v995 = vmax.f32 %v993, %v994
      %v996 = vrot.slane %v995, 4
      %v997 = vmax.f32 %v995, %v996
      %v998 = vrot.slane %v997, 2
      %v999 = vmax.f32 %v997, %v998
      %v1000 = vrot.slane %v999, 1
      %v1001 = vmax.f32 %v999, %v1000
      %v1002 = vsub.f32 %v993, %v1001
      %v1003 = vsub.f32 %v994, %v1001
      %v1004 = vpow.pop %v1002
      %v1005 = vpow.pop %v1003
      %v1006 = vadd.f32 %v1004, %v1005
      %v1007 = vrot.slane %v1006, 4
      %v1008 = vadd.f32 %v1006, %v1007
      %v1009 = vrot.slane %v1008, 2
      %v1010 = vadd.f32 %v1008, %v1009
      %v1011 = vrot.slane %v1010, 1
      %v1012 = vadd.f32 %v1010, %v1011
      %v1013 = vlog2.pop %v1012
      %v1014 = vmul.f32 %v1013, 0.6931472
      %v1015 = vmul.f32 %v1014, %v152
      %v1016 = vadd.f32 %v1001, %v1015
      %v1017 = vsub.f32 %v106, %v1016
      %v1018 = vsel %vm103, %v1017, 0.0
      %v1019 = vsub.f32 %v1018, %v123
      %v1020 = vsub.f32 %v1018, %v124
      %1021 = vmax.xlane.f32.xlu0 %v1019
      %v1022 = vpop.xlane.xlu0 %1021
      %1023 = vmax.xlane.f32.xlu0 %v1020
      %v1024 = vpop.xlane.xlu0 %1023
      %v1025 = vsub.f32 %v1019, %v1022
      %v1026 = vsub.f32 %v1020, %v1024
      %v1027 = vpow.pop %v1025
      %v1028 = vpow.pop %v1026
      %1029 = vadd.xlane.f32.xlu0 %v1027
      %v1030 = vpop.xlane.xlu0 %1029
      %1031 = vadd.xlane.f32.xlu0 %v1028
      %v1032 = vpop.xlane.xlu0 %1031
      %v1033 = vlog2.pop %v1030
      %v1034 = vmul.f32 %v1033, 0.6931472
      %v1035 = vlog2.pop %v1032
      %v1036 = vmul.f32 %v1035, 0.6931472
      %v1037 = vmul.f32 %v1034, %v152
      %v1038 = vmul.f32 %v1036, %v152
      %v1039 = vadd.f32 %v1022, %v1037
      %v1040 = vadd.f32 %v1024, %v1038
      %v1041 = vsub.f32 %v104, %v1039
      %v1042 = vsub.f32 %v105, %v1040
      %v1043 = vsel %vm101, %v1041, 0.0
      %v1044 = vsel %vm102, %v1042, 0.0
      %v1045 = vsub.f32 %v1043, %v123
      %v1046 = vsub.f32 %v1044, %v124
      %v1047 = vmax.f32 %v1045, %v1046
      %v1048 = vrot.slane %v1047, 4
      %v1049 = vmax.f32 %v1047, %v1048
      %v1050 = vrot.slane %v1049, 2
      %v1051 = vmax.f32 %v1049, %v1050
      %v1052 = vrot.slane %v1051, 1
      %v1053 = vmax.f32 %v1051, %v1052
      %v1054 = vsub.f32 %v1045, %v1053
      %v1055 = vsub.f32 %v1046, %v1053
      %v1056 = vpow.pop %v1054
      %v1057 = vpow.pop %v1055
      %v1058 = vadd.f32 %v1056, %v1057
      %v1059 = vrot.slane %v1058, 4
      %v1060 = vadd.f32 %v1058, %v1059
      %v1061 = vrot.slane %v1060, 2
      %v1062 = vadd.f32 %v1060, %v1061
      %v1063 = vrot.slane %v1062, 1
      %v1064 = vadd.f32 %v1062, %v1063
      %v1065 = vlog2.pop %v1064
      %v1066 = vmul.f32 %v1065, 0.6931472
      %v1067 = vmul.f32 %v1066, %v152
      %v1068 = vadd.f32 %v1053, %v1067
      %v1069 = vsub.f32 %v106, %v1068
      %v1070 = vsel %vm103, %v1069, 0.0
      %v1071 = vsub.f32 %v1070, %v123
      %v1072 = vsub.f32 %v1070, %v124
      %1073 = vmax.xlane.f32.xlu0 %v1071
      %v1074 = vpop.xlane.xlu0 %1073
      %1075 = vmax.xlane.f32.xlu0 %v1072
      %v1076 = vpop.xlane.xlu0 %1075
      %v1077 = vsub.f32 %v1071, %v1074
      %v1078 = vsub.f32 %v1072, %v1076
      %v1079 = vpow.pop %v1077
      %v1080 = vpow.pop %v1078
      %1081 = vadd.xlane.f32.xlu0 %v1079
      %v1082 = vpop.xlane.xlu0 %1081
      %1083 = vadd.xlane.f32.xlu0 %v1080
      %v1084 = vpop.xlane.xlu0 %1083
      %v1085 = vlog2.pop %v1082
      %v1086 = vmul.f32 %v1085, 0.6931472
      %v1087 = vlog2.pop %v1084
      %v1088 = vmul.f32 %v1087, 0.6931472
      %v1089 = vmul.f32 %v1086, %v152
      %v1090 = vmul.f32 %v1088, %v152
      %v1091 = vadd.f32 %v1074, %v1089
      %v1092 = vadd.f32 %v1076, %v1090
      %v1093 = vsub.f32 %v104, %v1091
      %v1094 = vsub.f32 %v105, %v1092
      %v1095 = vsel %vm101, %v1093, 0.0
      %v1096 = vsel %vm102, %v1094, 0.0
      %v1097 = vsub.f32 %v1095, %v123
      %v1098 = vsub.f32 %v1096, %v124
      %v1099 = vmax.f32 %v1097, %v1098
      %v1100 = vrot.slane %v1099, 4
      %v1101 = vmax.f32 %v1099, %v1100
      %v1102 = vrot.slane %v1101, 2
      %v1103 = vmax.f32 %v1101, %v1102
      %v1104 = vrot.slane %v1103, 1
      %v1105 = vmax.f32 %v1103, %v1104
      %v1106 = vsub.f32 %v1097, %v1105
      %v1107 = vsub.f32 %v1098, %v1105
      %v1108 = vpow.pop %v1106
      %v1109 = vpow.pop %v1107
      %v1110 = vadd.f32 %v1108, %v1109
      %v1111 = vrot.slane %v1110, 4
      %v1112 = vadd.f32 %v1110, %v1111
      %v1113 = vrot.slane %v1112, 2
      %v1114 = vadd.f32 %v1112, %v1113
      %v1115 = vrot.slane %v1114, 1
      %v1116 = vadd.f32 %v1114, %v1115
      %v1117 = vlog2.pop %v1116
      %v1118 = vmul.f32 %v1117, 0.6931472
      %v1119 = vmul.f32 %v1118, %v152
      %v1120 = vadd.f32 %v1105, %v1119
      %v1121 = vsub.f32 %v106, %v1120
      %v1122 = vsel %vm103, %v1121, 0.0
      %v1123 = vsub.f32 %v1122, %v123
      %v1124 = vsub.f32 %v1122, %v124
      %1125 = vmax.xlane.f32.xlu0 %v1123
      %v1126 = vpop.xlane.xlu0 %1125
      %1127 = vmax.xlane.f32.xlu0 %v1124
      %v1128 = vpop.xlane.xlu0 %1127
      %v1129 = vsub.f32 %v1123, %v1126
      %v1130 = vsub.f32 %v1124, %v1128
      %v1131 = vpow.pop %v1129
      %v1132 = vpow.pop %v1130
      %1133 = vadd.xlane.f32.xlu0 %v1131
      %v1134 = vpop.xlane.xlu0 %1133
      %1135 = vadd.xlane.f32.xlu0 %v1132
      %v1136 = vpop.xlane.xlu0 %1135
      %v1137 = vlog2.pop %v1134
      %v1138 = vmul.f32 %v1137, 0.6931472
      %v1139 = vlog2.pop %v1136
      %v1140 = vmul.f32 %v1139, 0.6931472
      %v1141 = vmul.f32 %v1138, %v152
      %v1142 = vmul.f32 %v1140, %v152
      %v1143 = vadd.f32 %v1126, %v1141
      %v1144 = vadd.f32 %v1128, %v1142
      %v1145 = vsub.f32 %v104, %v1143
      %v1146 = vsub.f32 %v105, %v1144
      %v1147 = vsel %vm101, %v1145, 0.0
      %v1148 = vsel %vm102, %v1146, 0.0
      %v1149 = vsub.f32 %v1147, %v123
      %v1150 = vsub.f32 %v1148, %v124
      %v1151 = vmax.f32 %v1149, %v1150
      %v1152 = vrot.slane %v1151, 4
      %v1153 = vmax.f32 %v1151, %v1152
      %v1154 = vrot.slane %v1153, 2
      %v1155 = vmax.f32 %v1153, %v1154
      %v1156 = vrot.slane %v1155, 1
      %v1157 = vmax.f32 %v1155, %v1156
      %v1158 = vsub.f32 %v1149, %v1157
      %v1159 = vsub.f32 %v1150, %v1157
      %v1160 = vpow.pop %v1158
      %v1161 = vpow.pop %v1159
      %v1162 = vadd.f32 %v1160, %v1161
      %v1163 = vrot.slane %v1162, 4
      %v1164 = vadd.f32 %v1162, %v1163
      %v1165 = vrot.slane %v1164, 2
      %v1166 = vadd.f32 %v1164, %v1165
      %v1167 = vrot.slane %v1166, 1
      %v1168 = vadd.f32 %v1166, %v1167
      %v1169 = vlog2.pop %v1168
      %v1170 = vmul.f32 %v1169, 0.6931472
      %v1171 = vmul.f32 %v1170, %v152
      %v1172 = vadd.f32 %v1157, %v1171
      %v1173 = vsub.f32 %v106, %v1172
      %v1174 = vsel %vm103, %v1173, 0.0
      %v1175 = vsub.f32 %v1174, %v123
      %v1176 = vsub.f32 %v1174, %v124
      %1177 = vmax.xlane.f32.xlu0 %v1175
      %v1178 = vpop.xlane.xlu0 %1177
      %1179 = vmax.xlane.f32.xlu0 %v1176
      %v1180 = vpop.xlane.xlu0 %1179
      %v1181 = vsub.f32 %v1175, %v1178
      %v1182 = vsub.f32 %v1176, %v1180
      %v1183 = vpow.pop %v1181
      %v1184 = vpow.pop %v1182
      %1185 = vadd.xlane.f32.xlu0 %v1183
      %v1186 = vpop.xlane.xlu0 %1185
      %1187 = vadd.xlane.f32.xlu0 %v1184
      %v1188 = vpop.xlane.xlu0 %1187
      %v1189 = vlog2.pop %v1186
      %v1190 = vmul.f32 %v1189, 0.6931472
      %v1191 = vlog2.pop %v1188
      %v1192 = vmul.f32 %v1191, 0.6931472
      %v1193 = vmul.f32 %v1190, %v152
      %v1194 = vmul.f32 %v1192, %v152
      %v1195 = vadd.f32 %v1178, %v1193
      %v1196 = vadd.f32 %v1180, %v1194
      %v1197 = vsub.f32 %v104, %v1195
      %v1198 = vsub.f32 %v105, %v1196
      %v1199 = vsel %vm101, %v1197, 0.0
      %v1200 = vsel %vm102, %v1198, 0.0
      %v1201 = vsub.f32 %v1199, %v123
      %v1202 = vsub.f32 %v1200, %v124
      %v1203 = vmax.f32 %v1201, %v1202
      %v1204 = vrot.slane %v1203, 4
      %v1205 = vmax.f32 %v1203, %v1204
      %v1206 = vrot.slane %v1205, 2
      %v1207 = vmax.f32 %v1205, %v1206
      %v1208 = vrot.slane %v1207, 1
      %v1209 = vmax.f32 %v1207, %v1208
      %v1210 = vsub.f32 %v1201, %v1209
      %v1211 = vsub.f32 %v1202, %v1209
      %v1212 = vpow.pop %v1210
      %v1213 = vpow.pop %v1211
      %v1214 = vadd.f32 %v1212, %v1213
      %v1215 = vrot.slane %v1214, 4
      %v1216 = vadd.f32 %v1214, %v1215
      %v1217 = vrot.slane %v1216, 2
      %v1218 = vadd.f32 %v1216, %v1217
      %v1219 = vrot.slane %v1218, 1
      %v1220 = vadd.f32 %v1218, %v1219
      %v1221 = vlog2.pop %v1220
      %v1222 = vmul.f32 %v1221, 0.6931472
      %v1223 = vmul.f32 %v1222, %v152
      %v1224 = vadd.f32 %v1209, %v1223
      %v1225 = vsub.f32 %v106, %v1224
      %v1226 = vsel %vm103, %v1225, 0.0
      %v1227 = vsub.f32 %v1226, %v123
      %v1228 = vsub.f32 %v1226, %v124
      %1229 = vmax.xlane.f32.xlu0 %v1227
      %v1230 = vpop.xlane.xlu0 %1229
      %1231 = vmax.xlane.f32.xlu0 %v1228
      %v1232 = vpop.xlane.xlu0 %1231
      %v1233 = vsub.f32 %v1227, %v1230
      %v1234 = vsub.f32 %v1228, %v1232
      %v1235 = vpow.pop %v1233
      %v1236 = vpow.pop %v1234
      %1237 = vadd.xlane.f32.xlu0 %v1235
      %v1238 = vpop.xlane.xlu0 %1237
      %1239 = vadd.xlane.f32.xlu0 %v1236
      %v1240 = vpop.xlane.xlu0 %1239
      %v1241 = vlog2.pop %v1238
      %v1242 = vmul.f32 %v1241, 0.6931472
      %v1243 = vlog2.pop %v1240
      %v1244 = vmul.f32 %v1243, 0.6931472
      %v1245 = vmul.f32 %v1242, %v152
      %v1246 = vmul.f32 %v1244, %v152
      %v1247 = vadd.f32 %v1230, %v1245
      %v1248 = vadd.f32 %v1232, %v1246
      %v1249 = vsub.f32 %v104, %v1247
      %v1250 = vsub.f32 %v105, %v1248
      %v1251 = vsel %vm101, %v1249, 0.0
      %v1252 = vsel %vm102, %v1250, 0.0
      %v1253 = vsub.f32 %v1251, %v123
      %v1254 = vsub.f32 %v1252, %v124
      %v1255 = vmax.f32 %v1253, %v1254
      %v1256 = vrot.slane %v1255, 4
      %v1257 = vmax.f32 %v1255, %v1256
      %v1258 = vrot.slane %v1257, 2
      %v1259 = vmax.f32 %v1257, %v1258
      %v1260 = vrot.slane %v1259, 1
      %v1261 = vmax.f32 %v1259, %v1260
      %v1262 = vsub.f32 %v1253, %v1261
      %v1263 = vsub.f32 %v1254, %v1261
      %v1264 = vpow.pop %v1262
      %v1265 = vpow.pop %v1263
      %v1266 = vadd.f32 %v1264, %v1265
      %v1267 = vrot.slane %v1266, 4
      %v1268 = vadd.f32 %v1266, %v1267
      %v1269 = vrot.slane %v1268, 2
      %v1270 = vadd.f32 %v1268, %v1269
      %v1271 = vrot.slane %v1270, 1
      %v1272 = vadd.f32 %v1270, %v1271
      %v1273 = vlog2.pop %v1272
      %v1274 = vmul.f32 %v1273, 0.6931472
      %v1275 = vmul.f32 %v1274, %v152
      %v1276 = vadd.f32 %v1261, %v1275
      %v1277 = vsub.f32 %v106, %v1276
      %v1278 = vsel %vm103, %v1277, 0.0
      %v1279 = vsub.f32 %v1278, %v123
      %v1280 = vsub.f32 %v1278, %v124
      %1281 = vmax.xlane.f32.xlu0 %v1279
      %v1282 = vpop.xlane.xlu0 %1281
      %1283 = vmax.xlane.f32.xlu0 %v1280
      %v1284 = vpop.xlane.xlu0 %1283
      %v1285 = vsub.f32 %v1279, %v1282
      %v1286 = vsub.f32 %v1280, %v1284
      %v1287 = vpow.pop %v1285
      %v1288 = vpow.pop %v1286
      %1289 = vadd.xlane.f32.xlu0 %v1287
      %v1290 = vpop.xlane.xlu0 %1289
      %1291 = vadd.xlane.f32.xlu0 %v1288
      %v1292 = vpop.xlane.xlu0 %1291
      %v1293 = vlog2.pop %v1290
      %v1294 = vmul.f32 %v1293, 0.6931472
      %v1295 = vlog2.pop %v1292
      %v1296 = vmul.f32 %v1295, 0.6931472
      %v1297 = vmul.f32 %v1294, %v152
      %v1298 = vmul.f32 %v1296, %v152
      %v1299 = vadd.f32 %v1282, %v1297
      %v1300 = vadd.f32 %v1284, %v1298
      %v1301 = vsub.f32 %v104, %v1299
      %v1302 = vsub.f32 %v105, %v1300
      %v1303 = vsel %vm101, %v1301, 0.0
      %v1304 = vsel %vm102, %v1302, 0.0
      %v1305 = vsub.f32 %v1303, %v123
      %v1306 = vsub.f32 %v1304, %v124
      %v1307 = vmax.f32 %v1305, %v1306
      %v1308 = vrot.slane %v1307, 4
      %v1309 = vmax.f32 %v1307, %v1308
      %v1310 = vrot.slane %v1309, 2
      %v1311 = vmax.f32 %v1309, %v1310
      %v1312 = vrot.slane %v1311, 1
      %v1313 = vmax.f32 %v1311, %v1312
      %v1314 = vsub.f32 %v1305, %v1313
      %v1315 = vsub.f32 %v1306, %v1313
      %v1316 = vpow.pop %v1314
      %v1317 = vpow.pop %v1315
      %v1318 = vadd.f32 %v1316, %v1317
      %v1319 = vrot.slane %v1318, 4
      %v1320 = vadd.f32 %v1318, %v1319
      %v1321 = vrot.slane %v1320, 2
      %v1322 = vadd.f32 %v1320, %v1321
      %v1323 = vrot.slane %v1322, 1
      %v1324 = vadd.f32 %v1322, %v1323
      %v1325 = vlog2.pop %v1324
      %v1326 = vmul.f32 %v1325, 0.6931472
      %v1327 = vmul.f32 %v1326, %v152
      %v1328 = vadd.f32 %v1313, %v1327
      %v1329 = vsub.f32 %v106, %v1328
      %v1330 = vsel %vm103, %v1329, 0.0
      %v1331 = vsub.f32 %v1330, %v123
      %v1332 = vsub.f32 %v1330, %v124
      %1333 = vmax.xlane.f32.xlu0 %v1331
      %v1334 = vpop.xlane.xlu0 %1333
      %1335 = vmax.xlane.f32.xlu0 %v1332
      %v1336 = vpop.xlane.xlu0 %1335
      %v1337 = vsub.f32 %v1331, %v1334
      %v1338 = vsub.f32 %v1332, %v1336
      %v1339 = vpow.pop %v1337
      %v1340 = vpow.pop %v1338
      %1341 = vadd.xlane.f32.xlu0 %v1339
      %v1342 = vpop.xlane.xlu0 %1341
      %1343 = vadd.xlane.f32.xlu0 %v1340
      %v1344 = vpop.xlane.xlu0 %1343
      %v1345 = vlog2.pop %v1342
      %v1346 = vmul.f32 %v1345, 0.6931472
      %v1347 = vlog2.pop %v1344
      %v1348 = vmul.f32 %v1347, 0.6931472
      %v1349 = vmul.f32 %v1346, %v152
      %v1350 = vmul.f32 %v1348, %v152
      %v1351 = vadd.f32 %v1334, %v1349
      %v1352 = vadd.f32 %v1336, %v1350
      %v1353 = vsub.f32 %v104, %v1351
      %v1354 = vsub.f32 %v105, %v1352
      %v1355 = vsel %vm101, %v1353, 0.0
      %v1356 = vsel %vm102, %v1354, 0.0
      %v1357 = vsub.f32 %v1355, %v123
      %v1358 = vsub.f32 %v1356, %v124
      %v1359 = vmax.f32 %v1357, %v1358
      %v1360 = vrot.slane %v1359, 4
      %v1361 = vmax.f32 %v1359, %v1360
      %v1362 = vrot.slane %v1361, 2
      %v1363 = vmax.f32 %v1361, %v1362
      %v1364 = vrot.slane %v1363, 1
      %v1365 = vmax.f32 %v1363, %v1364
      %v1366 = vsub.f32 %v1357, %v1365
      %v1367 = vsub.f32 %v1358, %v1365
      %v1368 = vpow.pop %v1366
      %v1369 = vpow.pop %v1367
      %v1370 = vadd.f32 %v1368, %v1369
      %v1371 = vrot.slane %v1370, 4
      %v1372 = vadd.f32 %v1370, %v1371
      %v1373 = vrot.slane %v1372, 2
      %v1374 = vadd.f32 %v1372, %v1373
      %v1375 = vrot.slane %v1374, 1
      %v1376 = vadd.f32 %v1374, %v1375
      %v1377 = vlog2.pop %v1376
      %v1378 = vmul.f32 %v1377, 0.6931472
      %v1379 = vmul.f32 %v1378, %v152
      %v1380 = vadd.f32 %v1365, %v1379
      %v1381 = vsub.f32 %v106, %v1380
      %v1382 = vsel %vm103, %v1381, 0.0
      %v1383 = vsub.f32 %v1382, %v123
      %v1384 = vsub.f32 %v1382, %v124
      %1385 = vmax.xlane.f32.xlu0 %v1383
      %v1386 = vpop.xlane.xlu0 %1385
      %1387 = vmax.xlane.f32.xlu0 %v1384
      %v1388 = vpop.xlane.xlu0 %1387
      %v1389 = vsub.f32 %v1383, %v1386
      %v1390 = vsub.f32 %v1384, %v1388
      %v1391 = vpow.pop %v1389
      %v1392 = vpow.pop %v1390
      %1393 = vadd.xlane.f32.xlu0 %v1391
      %v1394 = vpop.xlane.xlu0 %1393
      %1395 = vadd.xlane.f32.xlu0 %v1392
      %v1396 = vpop.xlane.xlu0 %1395
      %v1397 = vlog2.pop %v1394
      %v1398 = vmul.f32 %v1397, 0.6931472
      %v1399 = vlog2.pop %v1396
      %v1400 = vmul.f32 %v1399, 0.6931472
      %v1401 = vmul.f32 %v1398, %v152
      %v1402 = vmul.f32 %v1400, %v152
      %v1403 = vadd.f32 %v1386, %v1401
      %v1404 = vadd.f32 %v1388, %v1402
      %v1405 = vsub.f32 %v104, %v1403
      %v1406 = vsub.f32 %v105, %v1404
      %v1407 = vsel %vm101, %v1405, 0.0
      %v1408 = vsel %vm102, %v1406, 0.0
      %v1409 = vsub.f32 %v1407, %v123
      %v1410 = vsub.f32 %v1408, %v124
      %v1411 = vmax.f32 %v1409, %v1410
      %v1412 = vrot.slane %v1411, 4
      %v1413 = vmax.f32 %v1411, %v1412
      %v1414 = vrot.slane %v1413, 2
      %v1415 = vmax.f32 %v1413, %v1414
      %v1416 = vrot.slane %v1415, 1
      %v1417 = vmax.f32 %v1415, %v1416
      %v1418 = vsub.f32 %v1409, %v1417
      %v1419 = vsub.f32 %v1410, %v1417
      %v1420 = vpow.pop %v1418
      %v1421 = vpow.pop %v1419
      %v1422 = vadd.f32 %v1420, %v1421
      %v1423 = vrot.slane %v1422, 4
      %v1424 = vadd.f32 %v1422, %v1423
      %v1425 = vrot.slane %v1424, 2
      %v1426 = vadd.f32 %v1424, %v1425
      %v1427 = vrot.slane %v1426, 1
      %v1428 = vadd.f32 %v1426, %v1427
      %v1429 = vlog2.pop %v1428
      %v1430 = vmul.f32 %v1429, 0.6931472
      %v1431 = vmul.f32 %v1430, %v152
      %v1432 = vadd.f32 %v1417, %v1431
      %v1433 = vsub.f32 %v106, %v1432
      %v1434 = vsel %vm103, %v1433, 0.0
      %1435 = vst.msk [vmem:[#allocation3] sm:$0xff] %vm107, %v1407
      %1436 = vst.msk [vmem:[#allocation3 + $0x8] sm:$0xff] %vm107, %v1408
      %1437 = vst [vmem:[#allocation4] sm:$0x1] %v1434
      %v1438 = vsub.f32 %v1407, %v120
      %v1439 = vsub.f32 %v1408, %v121
      %v1440 = vand.u32 2147483647, %v1438
      %v1441 = vand.u32 2147483647, %v1439
      %v1442 = vsel %vm107, %v1440, -inf
      %v1443 = vsel %vm107, %v1441, -inf
      %v1444 = vmax.f32 %v1442, %v1443
      %1445 = vmax.xlane.f32.xlu0 %v1444
      %v1446 = vpop.xlane.xlu0 %1445
      %v1447 = vrot.slane %v1446, 4
      %v1448 = vmax.f32 %v1446, %v1447
      %v1449 = vrot.slane %v1448, 2
      %v1450 = vmax.f32 %v1448, %v1449
      %v1451 = vrot.slane %v1450, 1
      %v1452 = vmax.f32 %v1450, %v1451
      %s1453 = vtos %v1452
      %s1454 = sadd.s32 %s112, 1
      %p1455 = scmp.gt.f32.partialorder %s1453, 0.001442695
      %s1456 = scalar_select %p1455, 1, 0
    $region14: #{tpu_custom_call.1} parent=1 // loop_footer
      _
    $region15: #{tpu_custom_call.1} parent=1 // loop_footer_branch
      %111 = sbr.rel target = $region11
    $region16: #{tpu_custom_call.1} parent=1 // loop_exit
      _
    %v1457 = vld [vmem:[#allocation2] sm:$0xff]
    %v1458 = vld [vmem:[#allocation2 + $0x8] sm:$0xff]
    %v1459 = vld [vmem:[#allocation3] sm:$0xff]
    %v1460 = vld [vmem:[#allocation3 + $0x8] sm:$0xff]
    %v1461 = vld [vmem:[#allocation4] sm:$0x1]
    %1463 = vset.pattern.permute.xlu0 0
    %1464 = vperm.xlu0 %1463, %v1459
    %v1465 = vpop.permute.xlu0 %1464
    %1468 = vset.pattern.permute.xlu0 0
    %1469 = vperm.xlu0 %1468, %v1460
    %v1470 = vpop.permute.xlu0 %1469
    %v1473 = vperm.slane %v1461, 0
    %v1475 = vadd.f32 %v1465, %v1473
    %v1476 = vadd.f32 %v1470, %v1473
    %v1477 = vsub.f32 %v1475, %v1457
    %v1478 = vsub.f32 %v1476, %v1458
    %v1479 = vpow.pop %v1477
    %v1480 = vpow.pop %v1478
    %v1481 = vmul.f32 %v1479, %v1457
    %v1482 = vmul.f32 %v1480, %v1458
    %1483 = vadd.xlane.f32.xlu0 %v1481
    %v1484 = vpop.xlane.xlu0 %1483
    %1485 = vadd.xlane.f32.xlu0 %v1482
    %v1486 = vpop.xlane.xlu0 %1485
    %v1487 = vadd.f32 %v1484, %v1486
    %v1488 = vrot.slane %v1487, 4
    %v1489 = vadd.f32 %v1487, %v1488
    %v1490 = vrot.slane %v1489, 2
    %v1491 = vadd.f32 %v1489, %v1490
    %v1492 = vrot.slane %v1491, 1
    %v1493 = vadd.f32 %v1491, %v1492
    %v1494 = vmul.f32 %v1493, 0.013862943
    %vm1495 = vcmask 0
    %1496 = vst.msk [vmem:[#allocation5] sm:$0x1] %vm1495, %v1494
    // Predicated region
    $region17: #{tpu_custom_call.1} parent=1 // pred_check
      _
    $region18: #{tpu_custom_call.1} parent=1 // pred_check_branch
      %1498 = sbr.rel (0) target = $region20
    $region19: #{tpu_custom_call.1} parent=1 // pred_region
      %1500 = vsyncadd [#allocation6], 0
      %s1502 = sshll.u32 [#allocation5], 4
      %s1503 = int_to_ptr.vmem [resolvable:$true] %s1502
      %s1504 = sshll.u32 %s2, 4
      %s1505 = int_to_ptr.hbm [resolvable:$true] %s1504
      %1507 = dma.vmem_to_hbm [thread:$0]  %s1503, 16, %s1505, [#allocation6]
    $region20: #{tpu_custom_call.1} parent=1 // pred_fallthru
      _
    // Predicated region
    $region21: #{tpu_custom_call.1} parent=1 // pred_check
      _
    $region22: #{tpu_custom_call.1} parent=1 // pred_check_branch
      %1509 = sbr.rel (0) target = $region24
    $region23: #{tpu_custom_call.1} parent=1 // pred_region
      %1511 = dma.done [#allocation6], 16
    $region24: #{tpu_custom_call.1} parent=1 // pred_fallthru
      _
    %1512 = vsyncpa [#allocation6], 1

</llo_original>
